<compile_context>
chip_gen: v5e
topology: v5e:2x2
jax: 0.10.0
libtpu: 0.0.40
codegen_flags: <defaults>
</compile_context>

<pallas_src>
import functools

import jax
import jax.numpy as jnp
import numpy as np
from jax.experimental import pallas as pl
from jax.experimental.pallas import tpu as pltpu


def ealstm_kernel(i_gate_ref,   # [TB, H]         static input gate (resident per batch tile)
                  w_ref,        # [3, H, H]       per-gate recurrent weights (resident)
                  pre_ref,      # [TC, 3, TB, H]  pre-activations, streamed per time chunk
                  hn_ref,       # [TC, TB, H]     hidden states out (streamed)
                  cn_ref,       # [TC, TB, H]     cell states out (streamed)
                  h_scr, c_scr):  # [TB, H]       carry scratch (persists across chunks)
    tc = pre_ref.shape[0]

    # New batch tile starts -> reset the carry.
    @pl.when(pl.program_id(1) == 0)
    def _():
        h_scr[...] = jnp.zeros_like(h_scr)
        c_scr[...] = jnp.zeros_like(c_scr)

    h = h_scr[...]
    c = c_scr[...]
    i_gate = i_gate_ref[...]
    w_f = w_ref[0]
    w_o = w_ref[1]
    w_g = w_ref[2]

    # Short fixed chunk -> full static unroll.
    for s in range(tc):
        f = jnp.dot(h, w_f, preferred_element_type=jnp.float32) + pre_ref[s, 0]
        o = jnp.dot(h, w_o, preferred_element_type=jnp.float32) + pre_ref[s, 1]
        g = jnp.dot(h, w_g, preferred_element_type=jnp.float32) + pre_ref[s, 2]
        c = jax.nn.sigmoid(f) * c + i_gate * jnp.tanh(g)
        h = jax.nn.sigmoid(o) * jnp.tanh(c)
        hn_ref[s] = h
        cn_ref[s] = c

    h_scr[...] = h
    c_scr[...] = c


def _pick_time_block(T):
    for tc in (8, 4, 2, 1):
        if T % tc == 0:
            return tc
    return 1


@functools.partial(jax.jit, static_argnames=("time_block", "batch_block"))
def ealstm_model_forward(x_d, x_s, params, *, time_block=None, batch_block=None):
    """x_d: [B, T, Dd], x_s: [B, Ds] -> (out [B,1], h_n [B,T,H], c_n [B,T,H])."""
    B, T, Dd = x_d.shape
    H = params["w_sh"].shape[1]

    x_d = x_d.astype(jnp.float32)
    x_s = x_s.astype(jnp.float32)

    # Static input gate: computed once, plain XLA.
    i_gate = jax.nn.sigmoid(x_s @ params["w_sh"] + params["bias_s"][None, :])

    # Hoisted input projection: one big matmul, already in the kernel's streamed
    # layout [T, 3, B, H]; bias folded in here (gate order: f, o, g).
    w_ih = params["w_ih"].astype(jnp.float32).reshape(Dd, 3, H)
    pre = jnp.einsum("btd,dgh->tgbh", x_d, w_ih,
                     preferred_element_type=jnp.float32)
    pre = pre + params["bias"].astype(jnp.float32).reshape(1, 3, 1, H)

    # Per-gate recurrent weights stacked [3, H, H] (lane-aligned outputs).
    w_hh = params["w_hh"].astype(jnp.float32).reshape(H, 3, H)
    w_hh = jnp.transpose(w_hh, (1, 0, 2))

    # Tile choices.
    tb = batch_block if batch_block is not None else B
    assert B % tb == 0, "batch_block must divide B"
    tc = time_block if time_block is not None else _pick_time_block(T)
    assert T % tc == 0, "time_block must divide T"
    nb, nt = B // tb, T // tc

    out_spec = pl.BlockSpec((tc, tb, H), lambda b, t: (t, b, 0))

    hn_tm, cn_tm = pl.pallas_call(
        ealstm_kernel,
        out_shape=(
            jax.ShapeDtypeStruct((T, B, H), jnp.float32),
            jax.ShapeDtypeStruct((T, B, H), jnp.float32),
        ),
        grid_spec=pltpu.PrefetchScalarGridSpec(
            num_scalar_prefetch=0,
            grid=(nb, nt),
            in_specs=[
                pl.BlockSpec((tb, H), lambda b, t: (b, 0)),               # i_gate
                pl.BlockSpec((3, H, H), lambda b, t: (0, 0, 0)),          # w_hh stack
                pl.BlockSpec((tc, 3, tb, H), lambda b, t: (t, 0, b, 0)),  # pre-acts
            ],
            out_specs=[out_spec, out_spec],                               # hn, cn
            scratch_shapes=[
                pltpu.VMEM((tb, H), jnp.float32),   # h carry
                pltpu.VMEM((tb, H), jnp.float32),   # c carry
            ],
        ),
        compiler_params=pltpu.CompilerParams(
            dimension_semantics=("parallel", "arbitrary")),
    )(i_gate, w_hh, pre)

    # fc head on the last hidden state (dropout p=0.0 -> identity); plain XLA.
    out = hn_tm[-1] @ params["w_fc"] + params["b_fc"][None, :]

    # PyTorch interface is batch-first for h_n / c_n.
    h_n = jnp.transpose(hn_tm, (1, 0, 2))
    c_n = jnp.transpose(cn_tm, (1, 0, 2))
    return out, h_n, c_n


def ealstm_reference(x_d, x_s, params):
    """Pure-JAX reference for correctness check."""
    B, T, _ = x_d.shape
    H = params["w_sh"].shape[1]
    i_gate = jax.nn.sigmoid(x_s @ params["w_sh"] + params["bias_s"][None, :])
    h = jnp.zeros((B, H), jnp.float32)
    c = jnp.zeros((B, H), jnp.float32)
    hs, cs = [], []
    for t in range(T):
        gates = (h @ params["w_hh"] + params["bias"][None, :]
                 + x_d[:, t, :] @ params["w_ih"])
        f, o, g = gates[:, :H], gates[:, H:2 * H], gates[:, 2 * H:]
        c = jax.nn.sigmoid(f) * c + i_gate * jnp.tanh(g)
        h = jax.nn.sigmoid(o) * jnp.tanh(c)
        hs.append(h)
        cs.append(c)
    h_n = jnp.stack(hs, axis=1)
    c_n = jnp.stack(cs, axis=1)
    out = h_n[:, -1, :] @ params["w_fc"] + params["b_fc"][None, :]
    return out, h_n, c_n


def init_params(key, input_size_dyn, input_size_stat, hidden_size,
                initial_forget_bias=5):
    ks = jax.random.split(key, 5)
    H = hidden_size
    w_ih = 0.1 * jax.random.normal(ks[0], (input_size_dyn, 3 * H), jnp.float32)
    w_sh = 0.1 * jax.random.normal(ks[1], (input_size_stat, H), jnp.float32)
    # EA-LSTM reset_parameters: identity repeated 3x for the recurrent weights.
    w_hh = jnp.tile(jnp.eye(H, dtype=jnp.float32), (1, 3))
    bias = jnp.zeros((3 * H,), jnp.float32)
    bias = bias.at[:H].set(float(initial_forget_bias))
    bias_s = jnp.zeros((H,), jnp.float32)
    # fc = nn.Linear(hidden_size, 1)
    w_fc = 0.1 * jax.random.normal(ks[2], (H, 1), jnp.float32)
    b_fc = jnp.zeros((1,), jnp.float32)
    return dict(w_ih=w_ih, w_hh=w_hh, w_sh=w_sh, bias=bias, bias_s=bias_s,
                w_fc=w_fc, b_fc=b_fc)


if __name__ == "__main__":
    B, T, Dd, Ds, H = 8, 8, 8, 4, 32

    key = jax.random.PRNGKey(0)
    k_xd, k_xs, k_p = jax.random.split(key, 3)
    x_d = jax.random.normal(k_xd, (B, T, Dd), jnp.float32)
    x_s = jax.random.normal(k_xs, (B, Ds), jnp.float32)
    params = init_params(k_p, Dd, Ds, H, initial_forget_bias=5)

    out, h_n, c_n = ealstm_model_forward(x_d, x_s, params)
    jax.block_until_ready((out, h_n, c_n))

    out_r, h_r, c_r = ealstm_reference(x_d, x_s, params)
    assert out.shape == (B, 1) and h_n.shape == (B, T, H) and c_n.shape == (B, T, H)
    np.testing.assert_allclose(np.asarray(out), np.asarray(out_r), rtol=1e-4, atol=1e-4)
    np.testing.assert_allclose(np.asarray(h_n), np.asarray(h_r), rtol=1e-4, atol=1e-4)
    np.testing.assert_allclose(np.asarray(c_n), np.asarray(c_r), rtol=1e-4, atol=1e-4)

    print("KERNEL_OK")
</pallas_src>

<mosaic_0001>
module attributes {stable_mosaic.version = 11 : i64} {
  func.func @ealstm_kernel(%arg0: i32, %arg1: i32, %arg2: memref<8x32xf32, #tpu.memory_space<vmem>>, %arg3: memref<3x32x32xf32, #tpu.memory_space<vmem>>, %arg4: memref<8x3x8x32xf32, #tpu.memory_space<vmem>>, %arg5: memref<8x8x32xf32, #tpu.memory_space<vmem>>, %arg6: memref<8x8x32xf32, #tpu.memory_space<vmem>>, %arg7: memref<8x32xf32, #tpu.memory_space<vmem>>, %arg8: memref<8x32xf32, #tpu.memory_space<vmem>>) attributes {dimension_semantics = [#tpu.dimension_semantics<parallel>, #tpu.dimension_semantics<arbitrary>], iteration_bounds = array<i64: 1, 1>, scalar_prefetch = 0 : i64, scratch_operands = 2 : i64, tpu.core_type = #tpu.core_type<tc>, window_params = [{transform_indices = @transform_0, window_bounds = array<i64: 8, 32>}, {pipeline_mode = #tpu.pipeline_mode<synchronous>, transform_indices = @transform_1, window_bounds = array<i64: 3, 32, 32>}, {transform_indices = @transform_2, window_bounds = array<i64: 8, 3, 8, 32>}, {transform_indices = @transform_3, window_bounds = array<i64: 8, 8, 32>}, {transform_indices = @transform_4, window_bounds = array<i64: 8, 8, 32>}]} {
    %c0_i32 = arith.constant 0 : i32
    %0 = arith.cmpi eq, %arg1, %c0_i32 : i32
    %1 = arith.extui %0 : i1 to i32
    %c0_i32_0 = arith.constant 0 : i32
    %2 = arith.cmpi ne, %1, %c0_i32_0 : i32
    scf.if %2 {
      %cst_195 = arith.constant 0.000000e+00 : f32
      %286 = vector.broadcast %cst_195 : f32 to vector<8x32xf32>
      %c0_196 = arith.constant 0 : index
      %c0_197 = arith.constant 0 : index
      %287 = vector.load %arg7[%c0_196, %c0_197] : memref<8x32xf32, #tpu.memory_space<vmem>>, vector<8x32xf32>
      tpu.vector_store %arg7[%c0_196, %c0_197], %286 {strides = array<i32>} : memref<8x32xf32, #tpu.memory_space<vmem>>, vector<8x32xf32>,
      %cst_198 = arith.constant 0.000000e+00 : f32
      %288 = vector.broadcast %cst_198 : f32 to vector<8x32xf32>
      %c0_199 = arith.constant 0 : index
      %c0_200 = arith.constant 0 : index
      %289 = vector.load %arg8[%c0_199, %c0_200] : memref<8x32xf32, #tpu.memory_space<vmem>>, vector<8x32xf32>
      tpu.vector_store %arg8[%c0_199, %c0_200], %288 {strides = array<i32>} : memref<8x32xf32, #tpu.memory_space<vmem>>, vector<8x32xf32>,
    } else {
    }
    %c0 = arith.constant 0 : index
    %c0_1 = arith.constant 0 : index
    %3 = vector.load %arg7[%c0, %c0_1] : memref<8x32xf32, #tpu.memory_space<vmem>>, vector<8x32xf32>
    %c0_2 = arith.constant 0 : index
    %c0_3 = arith.constant 0 : index
    %4 = vector.load %arg8[%c0_2, %c0_3] : memref<8x32xf32, #tpu.memory_space<vmem>>, vector<8x32xf32>
    %c0_4 = arith.constant 0 : index
    %c0_5 = arith.constant 0 : index
    %5 = vector.load %arg2[%c0_4, %c0_5] : memref<8x32xf32, #tpu.memory_space<vmem>>, vector<8x32xf32>
    %c0_6 = arith.constant 0 : index
    %c0_7 = arith.constant 0 : index
    %c0_8 = arith.constant 0 : index
    %6 = vector.load %arg3[%c0_6, %c0_7, %c0_8] : memref<3x32x32xf32, #tpu.memory_space<vmem>>, vector<1x32x32xf32>
    %7 = vector.shape_cast %6 : vector<1x32x32xf32> to vector<32x32xf32>
    %c1 = arith.constant 1 : index
    %c0_9 = arith.constant 0 : index
    %c0_10 = arith.constant 0 : index
    %8 = vector.load %arg3[%c1, %c0_9, %c0_10] : memref<3x32x32xf32, #tpu.memory_space<vmem>>, vector<1x32x32xf32>
    %9 = vector.shape_cast %8 : vector<1x32x32xf32> to vector<32x32xf32>
    %c2 = arith.constant 2 : index
    %c0_11 = arith.constant 0 : index
    %c0_12 = arith.constant 0 : index
    %10 = vector.load %arg3[%c2, %c0_11, %c0_12] : memref<3x32x32xf32, #tpu.memory_space<vmem>>, vector<1x32x32xf32>
    %11 = vector.shape_cast %10 : vector<1x32x32xf32> to vector<32x32xf32>
    %cst = arith.constant dense<0.000000e+00> : vector<8x32xf32>
    %12 = tpu.matmul %3, %7, %cst {dimension_numbers = #tpu.dot_dimension_numbers<[1], [0], [0], [1], [0, 0, 1, 1], [], []>} : vector<8x32xf32>, vector<32x32xf32>, vector<8x32xf32> -> vector<8x32xf32>
    %c0_13 = arith.constant 0 : index
    %c0_14 = arith.constant 0 : index
    %c0_15 = arith.constant 0 : index
    %c0_16 = arith.constant 0 : index
    %13 = vector.load %arg4[%c0_13, %c0_14, %c0_15, %c0_16] : memref<8x3x8x32xf32, #tpu.memory_space<vmem>>, vector<1x1x8x32xf32>
    %14 = vector.shape_cast %13 : vector<1x1x8x32xf32> to vector<8x32xf32>
    %15 = arith.addf %12, %14 : vector<8x32xf32>
    %cst_17 = arith.constant dense<0.000000e+00> : vector<8x32xf32>
    %16 = tpu.matmul %3, %9, %cst_17 {dimension_numbers = #tpu.dot_dimension_numbers<[1], [0], [0], [1], [0, 0, 1, 1], [], []>} : vector<8x32xf32>, vector<32x32xf32>, vector<8x32xf32> -> vector<8x32xf32>
    %c0_18 = arith.constant 0 : index
    %c1_19 = arith.constant 1 : index
    %c0_20 = arith.constant 0 : index
    %c0_21 = arith.constant 0 : index
    %17 = vector.load %arg4[%c0_18, %c1_19, %c0_20, %c0_21] : memref<8x3x8x32xf32, #tpu.memory_space<vmem>>, vector<1x1x8x32xf32>
    %18 = vector.shape_cast %17 : vector<1x1x8x32xf32> to vector<8x32xf32>
    %19 = arith.addf %16, %18 : vector<8x32xf32>
    %cst_22 = arith.constant dense<0.000000e+00> : vector<8x32xf32>
    %20 = tpu.matmul %3, %11, %cst_22 {dimension_numbers = #tpu.dot_dimension_numbers<[1], [0], [0], [1], [0, 0, 1, 1], [], []>} : vector<8x32xf32>, vector<32x32xf32>, vector<8x32xf32> -> vector<8x32xf32>
    %c0_23 = arith.constant 0 : index
    %c2_24 = arith.constant 2 : index
    %c0_25 = arith.constant 0 : index
    %c0_26 = arith.constant 0 : index
    %21 = vector.load %arg4[%c0_23, %c2_24, %c0_25, %c0_26] : memref<8x3x8x32xf32, #tpu.memory_space<vmem>>, vector<1x1x8x32xf32>
    %22 = vector.shape_cast %21 : vector<1x1x8x32xf32> to vector<8x32xf32>
    %23 = arith.addf %20, %22 : vector<8x32xf32>
    %24 = arith.negf %15 : vector<8x32xf32>
    %25 = math.exp %24 : vector<8x32xf32>
    %cst_27 = arith.constant 1.000000e+00 : f32
    %26 = vector.broadcast %cst_27 : f32 to vector<8x32xf32>
    %27 = arith.addf %26, %25 : vector<8x32xf32>
    %28 = arith.divf %26, %27 : vector<8x32xf32>
    %29 = arith.mulf %28, %4 : vector<8x32xf32>
    %30 = math.tanh %23 : vector<8x32xf32>
    %31 = arith.mulf %5, %30 : vector<8x32xf32>
    %32 = arith.addf %29, %31 : vector<8x32xf32>
    %33 = arith.negf %19 : vector<8x32xf32>
    %34 = math.exp %33 : vector<8x32xf32>
    %cst_28 = arith.constant 1.000000e+00 : f32
    %35 = vector.broadcast %cst_28 : f32 to vector<8x32xf32>
    %36 = arith.addf %35, %34 : vector<8x32xf32>
    %37 = arith.divf %35, %36 : vector<8x32xf32>
    %38 = math.tanh %32 : vector<8x32xf32>
    %39 = arith.mulf %37, %38 : vector<8x32xf32>
    %c0_29 = arith.constant 0 : index
    %c0_30 = arith.constant 0 : index
    %c0_31 = arith.constant 0 : index
    %40 = vector.load %arg5[%c0_29, %c0_30, %c0_31] : memref<8x8x32xf32, #tpu.memory_space<vmem>>, vector<1x8x32xf32>
    %41 = vector.shape_cast %40 : vector<1x8x32xf32> to vector<8x32xf32>
    %42 = vector.shape_cast %39 : vector<8x32xf32> to vector<1x8x32xf32>
    tpu.vector_store %arg5[%c0_29, %c0_30, %c0_31], %42 {strides = array<i32>} : memref<8x8x32xf32, #tpu.memory_space<vmem>>, vector<1x8x32xf32>,
    %c0_32 = arith.constant 0 : index
    %c0_33 = arith.constant 0 : index
    %c0_34 = arith.constant 0 : index
    %43 = vector.load %arg6[%c0_32, %c0_33, %c0_34] : memref<8x8x32xf32, #tpu.memory_space<vmem>>, vector<1x8x32xf32>
    %44 = vector.shape_cast %43 : vector<1x8x32xf32> to vector<8x32xf32>
    %45 = vector.shape_cast %32 : vector<8x32xf32> to vector<1x8x32xf32>
    tpu.vector_store %arg6[%c0_32, %c0_33, %c0_34], %45 {strides = array<i32>} : memref<8x8x32xf32, #tpu.memory_space<vmem>>, vector<1x8x32xf32>,
    %cst_35 = arith.constant dense<0.000000e+00> : vector<8x32xf32>
    %46 = tpu.matmul %39, %7, %cst_35 {dimension_numbers = #tpu.dot_dimension_numbers<[1], [0], [0], [1], [0, 0, 1, 1], [], []>} : vector<8x32xf32>, vector<32x32xf32>, vector<8x32xf32> -> vector<8x32xf32>
    %c1_36 = arith.constant 1 : index
    %c0_37 = arith.constant 0 : index
    %c0_38 = arith.constant 0 : index
    %c0_39 = arith.constant 0 : index
    %47 = vector.load %arg4[%c1_36, %c0_37, %c0_38, %c0_39] : memref<8x3x8x32xf32, #tpu.memory_space<vmem>>, vector<1x1x8x32xf32>
    %48 = vector.shape_cast %47 : vector<1x1x8x32xf32> to vector<8x32xf32>
    %49 = arith.addf %46, %48 : vector<8x32xf32>
    %cst_40 = arith.constant dense<0.000000e+00> : vector<8x32xf32>
    %50 = tpu.matmul %39, %9, %cst_40 {dimension_numbers = #tpu.dot_dimension_numbers<[1], [0], [0], [1], [0, 0, 1, 1], [], []>} : vector<8x32xf32>, vector<32x32xf32>, vector<8x32xf32> -> vector<8x32xf32>
    %c1_41 = arith.constant 1 : index
    %c1_42 = arith.constant 1 : index
    %c0_43 = arith.constant 0 : index
    %c0_44 = arith.constant 0 : index
    %51 = vector.load %arg4[%c1_41, %c1_42, %c0_43, %c0_44] : memref<8x3x8x32xf32, #tpu.memory_space<vmem>>, vector<1x1x8x32xf32>
    %52 = vector.shape_cast %51 : vector<1x1x8x32xf32> to vector<8x32xf32>
    %53 = arith.addf %50, %52 : vector<8x32xf32>
    %cst_45 = arith.constant dense<0.000000e+00> : vector<8x32xf32>
    %54 = tpu.matmul %39, %11, %cst_45 {dimension_numbers = #tpu.dot_dimension_numbers<[1], [0], [0], [1], [0, 0, 1, 1], [], []>} : vector<8x32xf32>, vector<32x32xf32>, vector<8x32xf32> -> vector<8x32xf32>
    %c1_46 = arith.constant 1 : index
    %c2_47 = arith.constant 2 : index
    %c0_48 = arith.constant 0 : index
    %c0_49 = arith.constant 0 : index
    %55 = vector.load %arg4[%c1_46, %c2_47, %c0_48, %c0_49] : memref<8x3x8x32xf32, #tpu.memory_space<vmem>>, vector<1x1x8x32xf32>
    %56 = vector.shape_cast %55 : vector<1x1x8x32xf32> to vector<8x32xf32>
    %57 = arith.addf %54, %56 : vector<8x32xf32>
    %58 = arith.negf %49 : vector<8x32xf32>
    %59 = math.exp %58 : vector<8x32xf32>
    %cst_50 = arith.constant 1.000000e+00 : f32
    %60 = vector.broadcast %cst_50 : f32 to vector<8x32xf32>
    %61 = arith.addf %60, %59 : vector<8x32xf32>
    %62 = arith.divf %60, %61 : vector<8x32xf32>
    %63 = arith.mulf %62, %32 : vector<8x32xf32>
    %64 = math.tanh %57 : vector<8x32xf32>
    %65 = arith.mulf %5, %64 : vector<8x32xf32>
    %66 = arith.addf %63, %65 : vector<8x32xf32>
    %67 = arith.negf %53 : vector<8x32xf32>
    %68 = math.exp %67 : vector<8x32xf32>
    %cst_51 = arith.constant 1.000000e+00 : f32
    %69 = vector.broadcast %cst_51 : f32 to vector<8x32xf32>
    %70 = arith.addf %69, %68 : vector<8x32xf32>
    %71 = arith.divf %69, %70 : vector<8x32xf32>
    %72 = math.tanh %66 : vector<8x32xf32>
    %73 = arith.mulf %71, %72 : vector<8x32xf32>
    %c1_52 = arith.constant 1 : index
    %c0_53 = arith.constant 0 : index
    %c0_54 = arith.constant 0 : index
    %74 = vector.load %arg5[%c1_52, %c0_53, %c0_54] : memref<8x8x32xf32, #tpu.memory_space<vmem>>, vector<1x8x32xf32>
    %75 = vector.shape_cast %74 : vector<1x8x32xf32> to vector<8x32xf32>
    %76 = vector.shape_cast %73 : vector<8x32xf32> to vector<1x8x32xf32>
    tpu.vector_store %arg5[%c1_52, %c0_53, %c0_54], %76 {strides = array<i32>} : memref<8x8x32xf32, #tpu.memory_space<vmem>>, vector<1x8x32xf32>,
    %c1_55 = arith.constant 1 : index
    %c0_56 = arith.constant 0 : index
    %c0_57 = arith.constant 0 : index
    %77 = vector.load %arg6[%c1_55, %c0_56, %c0_57] : memref<8x8x32xf32, #tpu.memory_space<vmem>>, vector<1x8x32xf32>
    %78 = vector.shape_cast %77 : vector<1x8x32xf32> to vector<8x32xf32>
    %79 = vector.shape_cast %66 : vector<8x32xf32> to vector<1x8x32xf32>
    tpu.vector_store %arg6[%c1_55, %c0_56, %c0_57], %79 {strides = array<i32>} : memref<8x8x32xf32, #tpu.memory_space<vmem>>, vector<1x8x32xf32>,
    %cst_58 = arith.constant dense<0.000000e+00> : vector<8x32xf32>
    %80 = tpu.matmul %73, %7, %cst_58 {dimension_numbers = #tpu.dot_dimension_numbers<[1], [0], [0], [1], [0, 0, 1, 1], [], []>} : vector<8x32xf32>, vector<32x32xf32>, vector<8x32xf32> -> vector<8x32xf32>
    %c2_59 = arith.constant 2 : index
    %c0_60 = arith.constant 0 : index
    %c0_61 = arith.constant 0 : index
    %c0_62 = arith.constant 0 : index
    %81 = vector.load %arg4[%c2_59, %c0_60, %c0_61, %c0_62] : memref<8x3x8x32xf32, #tpu.memory_space<vmem>>, vector<1x1x8x32xf32>
    %82 = vector.shape_cast %81 : vector<1x1x8x32xf32> to vector<8x32xf32>
    %83 = arith.addf %80, %82 : vector<8x32xf32>
    %cst_63 = arith.constant dense<0.000000e+00> : vector<8x32xf32>
    %84 = tpu.matmul %73, %9, %cst_63 {dimension_numbers = #tpu.dot_dimension_numbers<[1], [0], [0], [1], [0, 0, 1, 1], [], []>} : vector<8x32xf32>, vector<32x32xf32>, vector<8x32xf32> -> vector<8x32xf32>
    %c2_64 = arith.constant 2 : index
    %c1_65 = arith.constant 1 : index
    %c0_66 = arith.constant 0 : index
    %c0_67 = arith.constant 0 : index
    %85 = vector.load %arg4[%c2_64, %c1_65, %c0_66, %c0_67] : memref<8x3x8x32xf32, #tpu.memory_space<vmem>>, vector<1x1x8x32xf32>
    %86 = vector.shape_cast %85 : vector<1x1x8x32xf32> to vector<8x32xf32>
    %87 = arith.addf %84, %86 : vector<8x32xf32>
    %cst_68 = arith.constant dense<0.000000e+00> : vector<8x32xf32>
    %88 = tpu.matmul %73, %11, %cst_68 {dimension_numbers = #tpu.dot_dimension_numbers<[1], [0], [0], [1], [0, 0, 1, 1], [], []>} : vector<8x32xf32>, vector<32x32xf32>, vector<8x32xf32> -> vector<8x32xf32>
    %c2_69 = arith.constant 2 : index
    %c2_70 = arith.constant 2 : index
    %c0_71 = arith.constant 0 : index
    %c0_72 = arith.constant 0 : index
    %89 = vector.load %arg4[%c2_69, %c2_70, %c0_71, %c0_72] : memref<8x3x8x32xf32, #tpu.memory_space<vmem>>, vector<1x1x8x32xf32>
    %90 = vector.shape_cast %89 : vector<1x1x8x32xf32> to vector<8x32xf32>
    %91 = arith.addf %88, %90 : vector<8x32xf32>
    %92 = arith.negf %83 : vector<8x32xf32>
    %93 = math.exp %92 : vector<8x32xf32>
    %cst_73 = arith.constant 1.000000e+00 : f32
    %94 = vector.broadcast %cst_73 : f32 to vector<8x32xf32>
    %95 = arith.addf %94, %93 : vector<8x32xf32>
    %96 = arith.divf %94, %95 : vector<8x32xf32>
    %97 = arith.mulf %96, %66 : vector<8x32xf32>
    %98 = math.tanh %91 : vector<8x32xf32>
    %99 = arith.mulf %5, %98 : vector<8x32xf32>
    %100 = arith.addf %97, %99 : vector<8x32xf32>
    %101 = arith.negf %87 : vector<8x32xf32>
    %102 = math.exp %101 : vector<8x32xf32>
    %cst_74 = arith.constant 1.000000e+00 : f32
    %103 = vector.broadcast %cst_74 : f32 to vector<8x32xf32>
    %104 = arith.addf %103, %102 : vector<8x32xf32>
    %105 = arith.divf %103, %104 : vector<8x32xf32>
    %106 = math.tanh %100 : vector<8x32xf32>
    %107 = arith.mulf %105, %106 : vector<8x32xf32>
    %c2_75 = arith.constant 2 : index
    %c0_76 = arith.constant 0 : index
    %c0_77 = arith.constant 0 : index
    %108 = vector.load %arg5[%c2_75, %c0_76, %c0_77] : memref<8x8x32xf32, #tpu.memory_space<vmem>>, vector<1x8x32xf32>
    %109 = vector.shape_cast %108 : vector<1x8x32xf32> to vector<8x32xf32>
    %110 = vector.shape_cast %107 : vector<8x32xf32> to vector<1x8x32xf32>
    tpu.vector_store %arg5[%c2_75, %c0_76, %c0_77], %110 {strides = array<i32>} : memref<8x8x32xf32, #tpu.memory_space<vmem>>, vector<1x8x32xf32>,
    %c2_78 = arith.constant 2 : index
    %c0_79 = arith.constant 0 : index
    %c0_80 = arith.constant 0 : index
    %111 = vector.load %arg6[%c2_78, %c0_79, %c0_80] : memref<8x8x32xf32, #tpu.memory_space<vmem>>, vector<1x8x32xf32>
    %112 = vector.shape_cast %111 : vector<1x8x32xf32> to vector<8x32xf32>
    %113 = vector.shape_cast %100 : vector<8x32xf32> to vector<1x8x32xf32>
    tpu.vector_store %arg6[%c2_78, %c0_79, %c0_80], %113 {strides = array<i32>} : memref<8x8x32xf32, #tpu.memory_space<vmem>>, vector<1x8x32xf32>,
    %cst_81 = arith.constant dense<0.000000e+00> : vector<8x32xf32>
    %114 = tpu.matmul %107, %7, %cst_81 {dimension_numbers = #tpu.dot_dimension_numbers<[1], [0], [0], [1], [0, 0, 1, 1], [], []>} : vector<8x32xf32>, vector<32x32xf32>, vector<8x32xf32> -> vector<8x32xf32>
    %c3 = arith.constant 3 : index
    %c0_82 = arith.constant 0 : index
    %c0_83 = arith.constant 0 : index
    %c0_84 = arith.constant 0 : index
    %115 = vector.load %arg4[%c3, %c0_82, %c0_83, %c0_84] : memref<8x3x8x32xf32, #tpu.memory_space<vmem>>, vector<1x1x8x32xf32>
    %116 = vector.shape_cast %115 : vector<1x1x8x32xf32> to vector<8x32xf32>
    %117 = arith.addf %114, %116 : vector<8x32xf32>
    %cst_85 = arith.constant dense<0.000000e+00> : vector<8x32xf32>
    %118 = tpu.matmul %107, %9, %cst_85 {dimension_numbers = #tpu.dot_dimension_numbers<[1], [0], [0], [1], [0, 0, 1, 1], [], []>} : vector<8x32xf32>, vector<32x32xf32>, vector<8x32xf32> -> vector<8x32xf32>
    %c3_86 = arith.constant 3 : index
    %c1_87 = arith.constant 1 : index
    %c0_88 = arith.constant 0 : index
    %c0_89 = arith.constant 0 : index
    %119 = vector.load %arg4[%c3_86, %c1_87, %c0_88, %c0_89] : memref<8x3x8x32xf32, #tpu.memory_space<vmem>>, vector<1x1x8x32xf32>
    %120 = vector.shape_cast %119 : vector<1x1x8x32xf32> to vector<8x32xf32>
    %121 = arith.addf %118, %120 : vector<8x32xf32>
    %cst_90 = arith.constant dense<0.000000e+00> : vector<8x32xf32>
    %122 = tpu.matmul %107, %11, %cst_90 {dimension_numbers = #tpu.dot_dimension_numbers<[1], [0], [0], [1], [0, 0, 1, 1], [], []>} : vector<8x32xf32>, vector<32x32xf32>, vector<8x32xf32> -> vector<8x32xf32>
    %c3_91 = arith.constant 3 : index
    %c2_92 = arith.constant 2 : index
    %c0_93 = arith.constant 0 : index
    %c0_94 = arith.constant 0 : index
    %123 = vector.load %arg4[%c3_91, %c2_92, %c0_93, %c0_94] : memref<8x3x8x32xf32, #tpu.memory_space<vmem>>, vector<1x1x8x32xf32>
    %124 = vector.shape_cast %123 : vector<1x1x8x32xf32> to vector<8x32xf32>
    %125 = arith.addf %122, %124 : vector<8x32xf32>
    %126 = arith.negf %117 : vector<8x32xf32>
    %127 = math.exp %126 : vector<8x32xf32>
    %cst_95 = arith.constant 1.000000e+00 : f32
    %128 = vector.broadcast %cst_95 : f32 to vector<8x32xf32>
    %129 = arith.addf %128, %127 : vector<8x32xf32>
    %130 = arith.divf %128, %129 : vector<8x32xf32>
    %131 = arith.mulf %130, %100 : vector<8x32xf32>
    %132 = math.tanh %125 : vector<8x32xf32>
    %133 = arith.mulf %5, %132 : vector<8x32xf32>
    %134 = arith.addf %131, %133 : vector<8x32xf32>
    %135 = arith.negf %121 : vector<8x32xf32>
    %136 = math.exp %135 : vector<8x32xf32>
    %cst_96 = arith.constant 1.000000e+00 : f32
    %137 = vector.broadcast %cst_96 : f32 to vector<8x32xf32>
    %138 = arith.addf %137, %136 : vector<8x32xf32>
    %139 = arith.divf %137, %138 : vector<8x32xf32>
    %140 = math.tanh %134 : vector<8x32xf32>
    %141 = arith.mulf %139, %140 : vector<8x32xf32>
    %c3_97 = arith.constant 3 : index
    %c0_98 = arith.constant 0 : index
    %c0_99 = arith.constant 0 : index
    %142 = vector.load %arg5[%c3_97, %c0_98, %c0_99] : memref<8x8x32xf32, #tpu.memory_space<vmem>>, vector<1x8x32xf32>
    %143 = vector.shape_cast %142 : vector<1x8x32xf32> to vector<8x32xf32>
    %144 = vector.shape_cast %141 : vector<8x32xf32> to vector<1x8x32xf32>
    tpu.vector_store %arg5[%c3_97, %c0_98, %c0_99], %144 {strides = array<i32>} : memref<8x8x32xf32, #tpu.memory_space<vmem>>, vector<1x8x32xf32>,
    %c3_100 = arith.constant 3 : index
    %c0_101 = arith.constant 0 : index
    %c0_102 = arith.constant 0 : index
    %145 = vector.load %arg6[%c3_100, %c0_101, %c0_102] : memref<8x8x32xf32, #tpu.memory_space<vmem>>, vector<1x8x32xf32>
    %146 = vector.shape_cast %145 : vector<1x8x32xf32> to vector<8x32xf32>
    %147 = vector.shape_cast %134 : vector<8x32xf32> to vector<1x8x32xf32>
    tpu.vector_store %arg6[%c3_100, %c0_101, %c0_102], %147 {strides = array<i32>} : memref<8x8x32xf32, #tpu.memory_space<vmem>>, vector<1x8x32xf32>,
    %cst_103 = arith.constant dense<0.000000e+00> : vector<8x32xf32>
    %148 = tpu.matmul %141, %7, %cst_103 {dimension_numbers = #tpu.dot_dimension_numbers<[1], [0], [0], [1], [0, 0, 1, 1], [], []>} : vector<8x32xf32>, vector<32x32xf32>, vector<8x32xf32> -> vector<8x32xf32>
    %c4 = arith.constant 4 : index
    %c0_104 = arith.constant 0 : index
    %c0_105 = arith.constant 0 : index
    %c0_106 = arith.constant 0 : index
    %149 = vector.load %arg4[%c4, %c0_104, %c0_105, %c0_106] : memref<8x3x8x32xf32, #tpu.memory_space<vmem>>, vector<1x1x8x32xf32>
    %150 = vector.shape_cast %149 : vector<1x1x8x32xf32> to vector<8x32xf32>
    %151 = arith.addf %148, %150 : vector<8x32xf32>
    %cst_107 = arith.constant dense<0.000000e+00> : vector<8x32xf32>
    %152 = tpu.matmul %141, %9, %cst_107 {dimension_numbers = #tpu.dot_dimension_numbers<[1], [0], [0], [1], [0, 0, 1, 1], [], []>} : vector<8x32xf32>, vector<32x32xf32>, vector<8x32xf32> -> vector<8x32xf32>
    %c4_108 = arith.constant 4 : index
    %c1_109 = arith.constant 1 : index
    %c0_110 = arith.constant 0 : index
    %c0_111 = arith.constant 0 : index
    %153 = vector.load %arg4[%c4_108, %c1_109, %c0_110, %c0_111] : memref<8x3x8x32xf32, #tpu.memory_space<vmem>>, vector<1x1x8x32xf32>
    %154 = vector.shape_cast %153 : vector<1x1x8x32xf32> to vector<8x32xf32>
    %155 = arith.addf %152, %154 : vector<8x32xf32>
    %cst_112 = arith.constant dense<0.000000e+00> : vector<8x32xf32>
    %156 = tpu.matmul %141, %11, %cst_112 {dimension_numbers = #tpu.dot_dimension_numbers<[1], [0], [0], [1], [0, 0, 1, 1], [], []>} : vector<8x32xf32>, vector<32x32xf32>, vector<8x32xf32> -> vector<8x32xf32>
    %c4_113 = arith.constant 4 : index
    %c2_114 = arith.constant 2 : index
    %c0_115 = arith.constant 0 : index
    %c0_116 = arith.constant 0 : index
    %157 = vector.load %arg4[%c4_113, %c2_114, %c0_115, %c0_116] : memref<8x3x8x32xf32, #tpu.memory_space<vmem>>, vector<1x1x8x32xf32>
    %158 = vector.shape_cast %157 : vector<1x1x8x32xf32> to vector<8x32xf32>
    %159 = arith.addf %156, %158 : vector<8x32xf32>
    %160 = arith.negf %151 : vector<8x32xf32>
    %161 = math.exp %160 : vector<8x32xf32>
    %cst_117 = arith.constant 1.000000e+00 : f32
    %162 = vector.broadcast %cst_117 : f32 to vector<8x32xf32>
    %163 = arith.addf %162, %161 : vector<8x32xf32>
    %164 = arith.divf %162, %163 : vector<8x32xf32>
    %165 = arith.mulf %164, %134 : vector<8x32xf32>
    %166 = math.tanh %159 : vector<8x32xf32>
    %167 = arith.mulf %5, %166 : vector<8x32xf32>
    %168 = arith.addf %165, %167 : vector<8x32xf32>
    %169 = arith.negf %155 : vector<8x32xf32>
    %170 = math.exp %169 : vector<8x32xf32>
    %cst_118 = arith.constant 1.000000e+00 : f32
    %171 = vector.broadcast %cst_118 : f32 to vector<8x32xf32>
    %172 = arith.addf %171, %170 : vector<8x32xf32>
    %173 = arith.divf %171, %172 : vector<8x32xf32>
    %174 = math.tanh %168 : vector<8x32xf32>
    %175 = arith.mulf %173, %174 : vector<8x32xf32>
    %c4_119 = arith.constant 4 : index
    %c0_120 = arith.constant 0 : index
    %c0_121 = arith.constant 0 : index
    %176 = vector.load %arg5[%c4_119, %c0_120, %c0_121] : memref<8x8x32xf32, #tpu.memory_space<vmem>>, vector<1x8x32xf32>
    %177 = vector.shape_cast %176 : vector<1x8x32xf32> to vector<8x32xf32>
    %178 = vector.shape_cast %175 : vector<8x32xf32> to vector<1x8x32xf32>
    tpu.vector_store %arg5[%c4_119, %c0_120, %c0_121], %178 {strides = array<i32>} : memref<8x8x32xf32, #tpu.memory_space<vmem>>, vector<1x8x32xf32>,
    %c4_122 = arith.constant 4 : index
    %c0_123 = arith.constant 0 : index
    %c0_124 = arith.constant 0 : index
    %179 = vector.load %arg6[%c4_122, %c0_123, %c0_124] : memref<8x8x32xf32, #tpu.memory_space<vmem>>, vector<1x8x32xf32>
    %180 = vector.shape_cast %179 : vector<1x8x32xf32> to vector<8x32xf32>
    %181 = vector.shape_cast %168 : vector<8x32xf32> to vector<1x8x32xf32>
    tpu.vector_store %arg6[%c4_122, %c0_123, %c0_124], %181 {strides = array<i32>} : memref<8x8x32xf32, #tpu.memory_space<vmem>>, vector<1x8x32xf32>,
    %cst_125 = arith.constant dense<0.000000e+00> : vector<8x32xf32>
    %182 = tpu.matmul %175, %7, %cst_125 {dimension_numbers = #tpu.dot_dimension_numbers<[1], [0], [0], [1], [0, 0, 1, 1], [], []>} : vector<8x32xf32>, vector<32x32xf32>, vector<8x32xf32> -> vector<8x32xf32>
    %c5 = arith.constant 5 : index
    %c0_126 = arith.constant 0 : index
    %c0_127 = arith.constant 0 : index
    %c0_128 = arith.constant 0 : index
    %183 = vector.load %arg4[%c5, %c0_126, %c0_127, %c0_128] : memref<8x3x8x32xf32, #tpu.memory_space<vmem>>, vector<1x1x8x32xf32>
    %184 = vector.shape_cast %183 : vector<1x1x8x32xf32> to vector<8x32xf32>
    %185 = arith.addf %182, %184 : vector<8x32xf32>
    %cst_129 = arith.constant dense<0.000000e+00> : vector<8x32xf32>
    %186 = tpu.matmul %175, %9, %cst_129 {dimension_numbers = #tpu.dot_dimension_numbers<[1], [0], [0], [1], [0, 0, 1, 1], [], []>} : vector<8x32xf32>, vector<32x32xf32>, vector<8x32xf32> -> vector<8x32xf32>
    %c5_130 = arith.constant 5 : index
    %c1_131 = arith.constant 1 : index
    %c0_132 = arith.constant 0 : index
    %c0_133 = arith.constant 0 : index
    %187 = vector.load %arg4[%c5_130, %c1_131, %c0_132, %c0_133] : memref<8x3x8x32xf32, #tpu.memory_space<vmem>>, vector<1x1x8x32xf32>
    %188 = vector.shape_cast %187 : vector<1x1x8x32xf32> to vector<8x32xf32>
    %189 = arith.addf %186, %188 : vector<8x32xf32>
    %cst_134 = arith.constant dense<0.000000e+00> : vector<8x32xf32>
    %190 = tpu.matmul %175, %11, %cst_134 {dimension_numbers = #tpu.dot_dimension_numbers<[1], [0], [0], [1], [0, 0, 1, 1], [], []>} : vector<8x32xf32>, vector<32x32xf32>, vector<8x32xf32> -> vector<8x32xf32>
    %c5_135 = arith.constant 5 : index
    %c2_136 = arith.constant 2 : index
    %c0_137 = arith.constant 0 : index
    %c0_138 = arith.constant 0 : index
    %191 = vector.load %arg4[%c5_135, %c2_136, %c0_137, %c0_138] : memref<8x3x8x32xf32, #tpu.memory_space<vmem>>, vector<1x1x8x32xf32>
    %192 = vector.shape_cast %191 : vector<1x1x8x32xf32> to vector<8x32xf32>
    %193 = arith.addf %190, %192 : vector<8x32xf32>
    %194 = arith.negf %185 : vector<8x32xf32>
    %195 = math.exp %194 : vector<8x32xf32>
    %cst_139 = arith.constant 1.000000e+00 : f32
    %196 = vector.broadcast %cst_139 : f32 to vector<8x32xf32>
    %197 = arith.addf %196, %195 : vector<8x32xf32>
    %198 = arith.divf %196, %197 : vector<8x32xf32>
    %199 = arith.mulf %198, %168 : vector<8x32xf32>
    %200 = math.tanh %193 : vector<8x32xf32>
    %201 = arith.mulf %5, %200 : vector<8x32xf32>
    %202 = arith.addf %199, %201 : vector<8x32xf32>
    %203 = arith.negf %189 : vector<8x32xf32>
    %204 = math.exp %203 : vector<8x32xf32>
    %cst_140 = arith.constant 1.000000e+00 : f32
    %205 = vector.broadcast %cst_140 : f32 to vector<8x32xf32>
    %206 = arith.addf %205, %204 : vector<8x32xf32>
    %207 = arith.divf %205, %206 : vector<8x32xf32>
    %208 = math.tanh %202 : vector<8x32xf32>
    %209 = arith.mulf %207, %208 : vector<8x32xf32>
    %c5_141 = arith.constant 5 : index
    %c0_142 = arith.constant 0 : index
    %c0_143 = arith.constant 0 : index
    %210 = vector.load %arg5[%c5_141, %c0_142, %c0_143] : memref<8x8x32xf32, #tpu.memory_space<vmem>>, vector<1x8x32xf32>
    %211 = vector.shape_cast %210 : vector<1x8x32xf32> to vector<8x32xf32>
    %212 = vector.shape_cast %209 : vector<8x32xf32> to vector<1x8x32xf32>
    tpu.vector_store %arg5[%c5_141, %c0_142, %c0_143], %212 {strides = array<i32>} : memref<8x8x32xf32, #tpu.memory_space<vmem>>, vector<1x8x32xf32>,
    %c5_144 = arith.constant 5 : index
    %c0_145 = arith.constant 0 : index
    %c0_146 = arith.constant 0 : index
    %213 = vector.load %arg6[%c5_144, %c0_145, %c0_146] : memref<8x8x32xf32, #tpu.memory_space<vmem>>, vector<1x8x32xf32>
    %214 = vector.shape_cast %213 : vector<1x8x32xf32> to vector<8x32xf32>
    %215 = vector.shape_cast %202 : vector<8x32xf32> to vector<1x8x32xf32>
    tpu.vector_store %arg6[%c5_144, %c0_145, %c0_146], %215 {strides = array<i32>} : memref<8x8x32xf32, #tpu.memory_space<vmem>>, vector<1x8x32xf32>,
    %cst_147 = arith.constant dense<0.000000e+00> : vector<8x32xf32>
    %216 = tpu.matmul %209, %7, %cst_147 {dimension_numbers = #tpu.dot_dimension_numbers<[1], [0], [0], [1], [0, 0, 1, 1], [], []>} : vector<8x32xf32>, vector<32x32xf32>, vector<8x32xf32> -> vector<8x32xf32>
    %c6 = arith.constant 6 : index
    %c0_148 = arith.constant 0 : index
    %c0_149 = arith.constant 0 : index
    %c0_150 = arith.constant 0 : index
    %217 = vector.load %arg4[%c6, %c0_148, %c0_149, %c0_150] : memref<8x3x8x32xf32, #tpu.memory_space<vmem>>, vector<1x1x8x32xf32>
    %218 = vector.shape_cast %217 : vector<1x1x8x32xf32> to vector<8x32xf32>
    %219 = arith.addf %216, %218 : vector<8x32xf32>
    %cst_151 = arith.constant dense<0.000000e+00> : vector<8x32xf32>
    %220 = tpu.matmul %209, %9, %cst_151 {dimension_numbers = #tpu.dot_dimension_numbers<[1], [0], [0], [1], [0, 0, 1, 1], [], []>} : vector<8x32xf32>, vector<32x32xf32>, vector<8x32xf32> -> vector<8x32xf32>
    %c6_152 = arith.constant 6 : index
    %c1_153 = arith.constant 1 : index
    %c0_154 = arith.constant 0 : index
    %c0_155 = arith.constant 0 : index
    %221 = vector.load %arg4[%c6_152, %c1_153, %c0_154, %c0_155] : memref<8x3x8x32xf32, #tpu.memory_space<vmem>>, vector<1x1x8x32xf32>
    %222 = vector.shape_cast %221 : vector<1x1x8x32xf32> to vector<8x32xf32>
    %223 = arith.addf %220, %222 : vector<8x32xf32>
    %cst_156 = arith.constant dense<0.000000e+00> : vector<8x32xf32>
    %224 = tpu.matmul %209, %11, %cst_156 {dimension_numbers = #tpu.dot_dimension_numbers<[1], [0], [0], [1], [0, 0, 1, 1], [], []>} : vector<8x32xf32>, vector<32x32xf32>, vector<8x32xf32> -> vector<8x32xf32>
    %c6_157 = arith.constant 6 : index
    %c2_158 = arith.constant 2 : index
    %c0_159 = arith.constant 0 : index
    %c0_160 = arith.constant 0 : index
    %225 = vector.load %arg4[%c6_157, %c2_158, %c0_159, %c0_160] : memref<8x3x8x32xf32, #tpu.memory_space<vmem>>, vector<1x1x8x32xf32>
    %226 = vector.shape_cast %225 : vector<1x1x8x32xf32> to vector<8x32xf32>
    %227 = arith.addf %224, %226 : vector<8x32xf32>
    %228 = arith.negf %219 : vector<8x32xf32>
    %229 = math.exp %228 : vector<8x32xf32>
    %cst_161 = arith.constant 1.000000e+00 : f32
    %230 = vector.broadcast %cst_161 : f32 to vector<8x32xf32>
    %231 = arith.addf %230, %229 : vector<8x32xf32>
    %232 = arith.divf %230, %231 : vector<8x32xf32>
    %233 = arith.mulf %232, %202 : vector<8x32xf32>
    %234 = math.tanh %227 : vector<8x32xf32>
    %235 = arith.mulf %5, %234 : vector<8x32xf32>
    %236 = arith.addf %233, %235 : vector<8x32xf32>
    %237 = arith.negf %223 : vector<8x32xf32>
    %238 = math.exp %237 : vector<8x32xf32>
    %cst_162 = arith.constant 1.000000e+00 : f32
    %239 = vector.broadcast %cst_162 : f32 to vector<8x32xf32>
    %240 = arith.addf %239, %238 : vector<8x32xf32>
    %241 = arith.divf %239, %240 : vector<8x32xf32>
    %242 = math.tanh %236 : vector<8x32xf32>
    %243 = arith.mulf %241, %242 : vector<8x32xf32>
    %c6_163 = arith.constant 6 : index
    %c0_164 = arith.constant 0 : index
    %c0_165 = arith.constant 0 : index
    %244 = vector.load %arg5[%c6_163, %c0_164, %c0_165] : memref<8x8x32xf32, #tpu.memory_space<vmem>>, vector<1x8x32xf32>
    %245 = vector.shape_cast %244 : vector<1x8x32xf32> to vector<8x32xf32>
    %246 = vector.shape_cast %243 : vector<8x32xf32> to vector<1x8x32xf32>
    tpu.vector_store %arg5[%c6_163, %c0_164, %c0_165], %246 {strides = array<i32>} : memref<8x8x32xf32, #tpu.memory_space<vmem>>, vector<1x8x32xf32>,
    %c6_166 = arith.constant 6 : index
    %c0_167 = arith.constant 0 : index
    %c0_168 = arith.constant 0 : index
    %247 = vector.load %arg6[%c6_166, %c0_167, %c0_168] : memref<8x8x32xf32, #tpu.memory_space<vmem>>, vector<1x8x32xf32>
    %248 = vector.shape_cast %247 : vector<1x8x32xf32> to vector<8x32xf32>
    %249 = vector.shape_cast %236 : vector<8x32xf32> to vector<1x8x32xf32>
    tpu.vector_store %arg6[%c6_166, %c0_167, %c0_168], %249 {strides = array<i32>} : memref<8x8x32xf32, #tpu.memory_space<vmem>>, vector<1x8x32xf32>,
    %cst_169 = arith.constant dense<0.000000e+00> : vector<8x32xf32>
    %250 = tpu.matmul %243, %7, %cst_169 {dimension_numbers = #tpu.dot_dimension_numbers<[1], [0], [0], [1], [0, 0, 1, 1], [], []>} : vector<8x32xf32>, vector<32x32xf32>, vector<8x32xf32> -> vector<8x32xf32>
    %c7 = arith.constant 7 : index
    %c0_170 = arith.constant 0 : index
    %c0_171 = arith.constant 0 : index
    %c0_172 = arith.constant 0 : index
    %251 = vector.load %arg4[%c7, %c0_170, %c0_171, %c0_172] : memref<8x3x8x32xf32, #tpu.memory_space<vmem>>, vector<1x1x8x32xf32>
    %252 = vector.shape_cast %251 : vector<1x1x8x32xf32> to vector<8x32xf32>
    %253 = arith.addf %250, %252 : vector<8x32xf32>
    %cst_173 = arith.constant dense<0.000000e+00> : vector<8x32xf32>
    %254 = tpu.matmul %243, %9, %cst_173 {dimension_numbers = #tpu.dot_dimension_numbers<[1], [0], [0], [1], [0, 0, 1, 1], [], []>} : vector<8x32xf32>, vector<32x32xf32>, vector<8x32xf32> -> vector<8x32xf32>
    %c7_174 = arith.constant 7 : index
    %c1_175 = arith.constant 1 : index
    %c0_176 = arith.constant 0 : index
    %c0_177 = arith.constant 0 : index
    %255 = vector.load %arg4[%c7_174, %c1_175, %c0_176, %c0_177] : memref<8x3x8x32xf32, #tpu.memory_space<vmem>>, vector<1x1x8x32xf32>
    %256 = vector.shape_cast %255 : vector<1x1x8x32xf32> to vector<8x32xf32>
    %257 = arith.addf %254, %256 : vector<8x32xf32>
    %cst_178 = arith.constant dense<0.000000e+00> : vector<8x32xf32>
    %258 = tpu.matmul %243, %11, %cst_178 {dimension_numbers = #tpu.dot_dimension_numbers<[1], [0], [0], [1], [0, 0, 1, 1], [], []>} : vector<8x32xf32>, vector<32x32xf32>, vector<8x32xf32> -> vector<8x32xf32>
    %c7_179 = arith.constant 7 : index
    %c2_180 = arith.constant 2 : index
    %c0_181 = arith.constant 0 : index
    %c0_182 = arith.constant 0 : index
    %259 = vector.load %arg4[%c7_179, %c2_180, %c0_181, %c0_182] : memref<8x3x8x32xf32, #tpu.memory_space<vmem>>, vector<1x1x8x32xf32>
    %260 = vector.shape_cast %259 : vector<1x1x8x32xf32> to vector<8x32xf32>
    %261 = arith.addf %258, %260 : vector<8x32xf32>
    %262 = arith.negf %253 : vector<8x32xf32>
    %263 = math.exp %262 : vector<8x32xf32>
    %cst_183 = arith.constant 1.000000e+00 : f32
    %264 = vector.broadcast %cst_183 : f32 to vector<8x32xf32>
    %265 = arith.addf %264, %263 : vector<8x32xf32>
    %266 = arith.divf %264, %265 : vector<8x32xf32>
    %267 = arith.mulf %266, %236 : vector<8x32xf32>
    %268 = math.tanh %261 : vector<8x32xf32>
    %269 = arith.mulf %5, %268 : vector<8x32xf32>
    %270 = arith.addf %267, %269 : vector<8x32xf32>
    %271 = arith.negf %257 : vector<8x32xf32>
    %272 = math.exp %271 : vector<8x32xf32>
    %cst_184 = arith.constant 1.000000e+00 : f32
    %273 = vector.broadcast %cst_184 : f32 to vector<8x32xf32>
    %274 = arith.addf %273, %272 : vector<8x32xf32>
    %275 = arith.divf %273, %274 : vector<8x32xf32>
    %276 = math.tanh %270 : vector<8x32xf32>
    %277 = arith.mulf %275, %276 : vector<8x32xf32>
    %c7_185 = arith.constant 7 : index
    %c0_186 = arith.constant 0 : index
    %c0_187 = arith.constant 0 : index
    %278 = vector.load %arg5[%c7_185, %c0_186, %c0_187] : memref<8x8x32xf32, #tpu.memory_space<vmem>>, vector<1x8x32xf32>
    %279 = vector.shape_cast %278 : vector<1x8x32xf32> to vector<8x32xf32>
    %280 = vector.shape_cast %277 : vector<8x32xf32> to vector<1x8x32xf32>
    tpu.vector_store %arg5[%c7_185, %c0_186, %c0_187], %280 {strides = array<i32>} : memref<8x8x32xf32, #tpu.memory_space<vmem>>, vector<1x8x32xf32>,
    %c7_188 = arith.constant 7 : index
    %c0_189 = arith.constant 0 : index
    %c0_190 = arith.constant 0 : index
    %281 = vector.load %arg6[%c7_188, %c0_189, %c0_190] : memref<8x8x32xf32, #tpu.memory_space<vmem>>, vector<1x8x32xf32>
    %282 = vector.shape_cast %281 : vector<1x8x32xf32> to vector<8x32xf32>
    %283 = vector.shape_cast %270 : vector<8x32xf32> to vector<1x8x32xf32>
    tpu.vector_store %arg6[%c7_188, %c0_189, %c0_190], %283 {strides = array<i32>} : memref<8x8x32xf32, #tpu.memory_space<vmem>>, vector<1x8x32xf32>,
    %c0_191 = arith.constant 0 : index
    %c0_192 = arith.constant 0 : index
    %284 = vector.load %arg7[%c0_191, %c0_192] : memref<8x32xf32, #tpu.memory_space<vmem>>, vector<8x32xf32>
    tpu.vector_store %arg7[%c0_191, %c0_192], %277 {strides = array<i32>} : memref<8x32xf32, #tpu.memory_space<vmem>>, vector<8x32xf32>,
    %c0_193 = arith.constant 0 : index
    %c0_194 = arith.constant 0 : index
    %285 = vector.load %arg8[%c0_193, %c0_194] : memref<8x32xf32, #tpu.memory_space<vmem>>, vector<8x32xf32>
    tpu.vector_store %arg8[%c0_193, %c0_194], %270 {strides = array<i32>} : memref<8x32xf32, #tpu.memory_space<vmem>>, vector<8x32xf32>,
    return
  }
  func.func @transform_0(%arg0: i32, %arg1: i32) -> (i32, i32) {
    %c0_i32 = arith.constant 0 : i32
    %c0_i32_0 = arith.constant 0 : i32
    return %arg0, %c0_i32 : i32, i32
  }
  func.func @transform_1(%arg0: i32, %arg1: i32) -> (i32, i32, i32) {
    %c0_i32 = arith.constant 0 : i32
    %c0_i32_0 = arith.constant 0 : i32
    %c0_i32_1 = arith.constant 0 : i32
    %c0_i32_2 = arith.constant 0 : i32
    return %c0_i32, %c0_i32_0, %c0_i32_1 : i32, i32, i32
  }
  func.func @transform_2(%arg0: i32, %arg1: i32) -> (i32, i32, i32, i32) {
    %c0_i32 = arith.constant 0 : i32
    %c0_i32_0 = arith.constant 0 : i32
    %c0_i32_1 = arith.constant 0 : i32
    return %arg1, %c0_i32, %arg0, %c0_i32_0 : i32, i32, i32, i32
  }
  func.func @transform_3(%arg0: i32, %arg1: i32) -> (i32, i32, i32) {
    %c0_i32 = arith.constant 0 : i32
    %c0_i32_0 = arith.constant 0 : i32
    return %arg1, %arg0, %c0_i32 : i32, i32, i32
  }
  func.func @transform_4(%arg0: i32, %arg1: i32) -> (i32, i32, i32) {
    %c0_i32 = arith.constant 0 : i32
    %c0_i32_0 = arith.constant 0 : i32
    return %arg1, %arg0, %c0_i32 : i32, i32, i32
  }
}

</mosaic_0001>

<llo_original>
// kernel: ealstm_model_forward.1
$region0: #{ealstm_model_forward.1}
  #allocation0 [shape = 'u32[]', space=smem, size = 0x4, offset = 0x4, fixed_abs, tag = 'smem constant byte address 0x4 - core index']
  #allocation1 [shape = 'u32[72,128]{1,0:T(1,128)}', space=vmem, size = 0x9000, scoped, tag = 'internal scratch']
  #allocation2 [shape = 'f32[8,32]{1,0:T(8,128)}', space=vmem, size = 0x1000, scoped, tag = 'scratch operand']
  #allocation3 [shape = 'f32[8,32]{1,0:T(8,128)}', space=vmem, size = 0x1000, scoped, tag = 'scratch operand']
  %s0 = inlined_call_operand.vmem [shape: f32[8,32], index: 0, kind: input, shape index: {}]
  %s1 = inlined_call_operand.vmem [shape: f32[3,32,32], index: 1, kind: input, shape index: {}]
  %s2 = inlined_call_operand.vmem [shape: f32[8,3,8,32], index: 2, kind: input, shape index: {}]
  %s3 = inlined_call_operand.vmem [shape: f32[8,8,32], index: 3, kind: output, shape index: {0}]
  %s4 = inlined_call_operand.vmem [shape: f32[8,8,32], index: 4, kind: output, shape index: {1}]
  %5 = xla_tuple %s3, %s4
  %s6 = sld [smem:[#allocation0]]
  $region34: #{ealstm_model_forward.1} parent=0
    _
  %s8 = ssub.s32 1, %s6
  %s9 = scalar_select 0, %s8, %s6
  // Predicated region
  $region2: #{ealstm_model_forward.1} parent=0 // pred_check
    _
  $region3: #{ealstm_model_forward.1} parent=0 // pred_check_branch
    %11 = sbr.rel (0) target = $region5
  $region4: #{ealstm_model_forward.1} parent=0 // pred_region
    _
  $region5: #{ealstm_model_forward.1} parent=0 // pred_fallthru
    _
  // Predicated region
  $region6: #{ealstm_model_forward.1} parent=0 // pred_check
    _
  $region7: #{ealstm_model_forward.1} parent=0 // pred_check_branch
    %13 = sbr.rel (0) target = $region9
  $region8: #{ealstm_model_forward.1} parent=0 // pred_region
    _
  $region9: #{ealstm_model_forward.1} parent=0 // pred_fallthru
    _
  // Predicated region
  $region10: #{ealstm_model_forward.1} parent=0 // pred_check
    _
  $region11: #{ealstm_model_forward.1} parent=0 // pred_check_branch
    %15 = sbr.rel (0) target = $region13
  $region12: #{ealstm_model_forward.1} parent=0 // pred_region
    _
  $region13: #{ealstm_model_forward.1} parent=0 // pred_fallthru
    _
  %p16 = scmp.eq.s32.totalorder 0, 0
  // Predicated region
  $region14: #{ealstm_model_forward.1} parent=0 // pred_check
    %p17 = pneg %p16
  $region15: #{ealstm_model_forward.1} parent=0 // pred_check_branch
    %19 = sbr.rel (%p17) target = $region17
  $region16: #{ealstm_model_forward.1} parent=0 // pred_region
    %vm20 = vcmask 261120
    %21 = vst.msk [vmem:[#allocation2] sm:$0xff] %vm20, 0.0
    %22 = vst.msk [vmem:[#allocation3] sm:$0xff] %vm20, 0.0
  $region17: #{ealstm_model_forward.1} parent=0 // pred_fallthru
    _
  %v23 = vld [vmem:[#allocation2] sm:$0xff]
  %v24 = vld [vmem:[#allocation3] sm:$0xff]
  %v25 = vld [vmem:[%s0] sm:$0xff]
  %v26 = vld [vmem:[%s1] sm:$0xff]
  %v27 = vld [vmem:[%s1 + $0x8] sm:$0xff]
  %v28 = vld [vmem:[%s1 + $0x10] sm:$0xff]
  %v29 = vld [vmem:[%s1 + $0x18] sm:$0xff]
  %s30 = scalar_lea.vmem %s1, 32
  %v31 = vld [vmem:[%s30] sm:$0xff]
  %v32 = vld [vmem:[%s30 + $0x8] sm:$0xff]
  %v33 = vld [vmem:[%s30 + $0x10] sm:$0xff]
  %v34 = vld [vmem:[%s30 + $0x18] sm:$0xff]
  %s35 = scalar_lea.vmem %s1, 64
  %v36 = vld [vmem:[%s35] sm:$0xff]
  %v37 = vld [vmem:[%s35 + $0x8] sm:$0xff]
  %v38 = vld [vmem:[%s35 + $0x10] sm:$0xff]
  %v39 = vld [vmem:[%s35 + $0x18] sm:$0xff]
  %v40 = vld [vmem:[%s2] sm:$0xff]
  %vm41 = vcmask 261120
  %v43 = vsel %vm41, %v23, 0
  %45 = vmatpush.msra.mxu0 0.0
  %46 = vmatpush.msra.mxu0 0.0
  %47 = vmatpush.msra.mxu0 0.0
  %48 = vmatpush.msra.mxu0 0.0
  %49 = vmatpush.msra.mxu0 0.0
  %50 = vmatpush.msra.mxu0 0.0
  %51 = vmatpush.msra.mxu0 0.0
  %52 = vmatpush.msra.mxu0 0.0
  %53 = vmatpush.msra.mxu0 0.0
  %54 = vmatpush.msra.mxu0 0.0
  %55 = vmatpush.msra.mxu0 0.0
  %56 = vmatpush.msra.mxu0 0.0
  %57 = vmatpush.msra.mxu0 %v29
  %58 = vmatpush.msra.mxu0 %v28
  %59 = vmatpush.msra.mxu0 %v27
  %60 = vmatpush.msra.mxu0 %v26
  %61 = vmatmul.f32.gmra.mxu0 %v43
  %v62 = vpop.f32.mrf.mxu0
  %v63 = vadd.f32 %v40, %v62
  %64 = vdwg.mxu0
  %s65 = scalar_lea.vmem %s2, 8
  %v66 = vld [vmem:[%s65] sm:$0xff]
  %67 = vmatpush.msra.mxu0 0.0
  %68 = vmatpush.msra.mxu0 0.0
  %69 = vmatpush.msra.mxu0 0.0
  %70 = vmatpush.msra.mxu0 0.0
  %71 = vmatpush.msra.mxu0 0.0
  %72 = vmatpush.msra.mxu0 0.0
  %73 = vmatpush.msra.mxu0 0.0
  %74 = vmatpush.msra.mxu0 0.0
  %75 = vmatpush.msra.mxu0 0.0
  %76 = vmatpush.msra.mxu0 0.0
  %77 = vmatpush.msra.mxu0 0.0
  %78 = vmatpush.msra.mxu0 0.0
  %79 = vmatpush.msra.mxu0 %v34
  %80 = vmatpush.msra.mxu0 %v33
  %81 = vmatpush.msra.mxu0 %v32
  %82 = vmatpush.msra.mxu0 %v31
  %83 = vmatmul.f32.gmra.mxu0 %v43
  %v84 = vpop.f32.mrf.mxu0
  %v85 = vadd.f32 %v66, %v84
  %86 = vdwg.mxu0
  %s87 = scalar_lea.vmem %s2, 16
  %v88 = vld [vmem:[%s87] sm:$0xff]
  %89 = vmatpush.msra.mxu0 0.0
  %90 = vmatpush.msra.mxu0 0.0
  %91 = vmatpush.msra.mxu0 0.0
  %92 = vmatpush.msra.mxu0 0.0
  %93 = vmatpush.msra.mxu0 0.0
  %94 = vmatpush.msra.mxu0 0.0
  %95 = vmatpush.msra.mxu0 0.0
  %96 = vmatpush.msra.mxu0 0.0
  %97 = vmatpush.msra.mxu0 0.0
  %98 = vmatpush.msra.mxu0 0.0
  %99 = vmatpush.msra.mxu0 0.0
  %100 = vmatpush.msra.mxu0 0.0
  %101 = vmatpush.msra.mxu0 %v39
  %102 = vmatpush.msra.mxu0 %v38
  %103 = vmatpush.msra.mxu0 %v37
  %104 = vmatpush.msra.mxu0 %v36
  %105 = vmatmul.f32.gmra.mxu0 %v43
  %v106 = vpop.f32.mrf.mxu0
  %v107 = vadd.f32 %v88, %v106
  %108 = vdwg.mxu0
  %v109 = vxor.u32 %v63, 2147483648
  %v110 = vmul.f32 %v109, 1.442695
  %v111 = vpow.pop %v110
  %v112 = vadd.f32 %v111, 1.0
  %v113 = vrcp.pop %v112
  %v114 = vmul.f32 %v112, %v113
  %v115 = vsub.f32 1.0, %v114
  %v116 = vmul.f32 %v113, %v115
  %v117 = vadd.f32 %v113, %v116
  %vm118 = vweird.f32 %v112
  %vm119 = vweird.f32 %v113
  %vm120 = vmor %vm118, %vm119
  %v121 = vsel %vm120, %v113, %v117
  %v122 = vand.u32 2147483647, %v112
  %vm123 = vcmp.eq.f32.partialorder %v122, 8.507059e+37
  %v124 = vand.u32 %v112, 2147483648
  %v125 = vor.u32 1.1754944e-38, %v124
  %v126 = vsel %vm123, %v125, %v121
  %v127 = vmul.f32 1.0, %v126
  %v128 = vmul.f32 %v127, %v24
  %v129 = vtanh.pop %v107
  %v130 = vmul.f32 %v25, %v129
  %v131 = vadd.f32 %v128, %v130
  %v132 = vxor.u32 %v85, 2147483648
  %v133 = vmul.f32 %v132, 1.442695
  %v134 = vpow.pop %v133
  %v135 = vadd.f32 %v134, 1.0
  %v136 = vrcp.pop %v135
  %v137 = vmul.f32 %v135, %v136
  %v138 = vsub.f32 1.0, %v137
  %v139 = vmul.f32 %v136, %v138
  %v140 = vadd.f32 %v136, %v139
  %vm141 = vweird.f32 %v135
  %vm142 = vweird.f32 %v136
  %vm143 = vmor %vm141, %vm142
  %v144 = vsel %vm143, %v136, %v140
  %v145 = vand.u32 2147483647, %v135
  %vm146 = vcmp.eq.f32.partialorder %v145, 8.507059e+37
  %v147 = vand.u32 %v135, 2147483648
  %v148 = vor.u32 1.1754944e-38, %v147
  %v149 = vsel %vm146, %v148, %v144
  %v150 = vmul.f32 1.0, %v149
  %v151 = vtanh.pop %v131
  %v152 = vmul.f32 %v150, %v151
  %153 = vst.msk [vmem:[%s3] sm:$0xff] %vm41, %v152
  %154 = vst.msk [vmem:[%s4] sm:$0xff] %vm41, %v131
  %s155 = scalar_lea.vmem %s2, 24
  %v156 = vld [vmem:[%s155] sm:$0xff]
  %v158 = vsel %vm41, %v152, 0
  %160 = vmatpush.msra.mxu0 0.0
  %161 = vmatpush.msra.mxu0 0.0
  %162 = vmatpush.msra.mxu0 0.0
  %163 = vmatpush.msra.mxu0 0.0
  %164 = vmatpush.msra.mxu0 0.0
  %165 = vmatpush.msra.mxu0 0.0
  %166 = vmatpush.msra.mxu0 0.0
  %167 = vmatpush.msra.mxu0 0.0
  %168 = vmatpush.msra.mxu0 0.0
  %169 = vmatpush.msra.mxu0 0.0
  %170 = vmatpush.msra.mxu0 0.0
  %171 = vmatpush.msra.mxu0 0.0
  %172 = vmatpush.msra.mxu0 %v29
  %173 = vmatpush.msra.mxu0 %v28
  %174 = vmatpush.msra.mxu0 %v27
  %175 = vmatpush.msra.mxu0 %v26
  %176 = vmatmul.f32.gmra.mxu0 %v158
  %v177 = vpop.f32.mrf.mxu0
  %v178 = vadd.f32 %v156, %v177
  %179 = vdwg.mxu0
  %s180 = scalar_lea.vmem %s2, 32
  %v181 = vld [vmem:[%s180] sm:$0xff]
  %182 = vmatpush.msra.mxu0 0.0
  %183 = vmatpush.msra.mxu0 0.0
  %184 = vmatpush.msra.mxu0 0.0
  %185 = vmatpush.msra.mxu0 0.0
  %186 = vmatpush.msra.mxu0 0.0
  %187 = vmatpush.msra.mxu0 0.0
  %188 = vmatpush.msra.mxu0 0.0
  %189 = vmatpush.msra.mxu0 0.0
  %190 = vmatpush.msra.mxu0 0.0
  %191 = vmatpush.msra.mxu0 0.0
  %192 = vmatpush.msra.mxu0 0.0
  %193 = vmatpush.msra.mxu0 0.0
  %194 = vmatpush.msra.mxu0 %v34
  %195 = vmatpush.msra.mxu0 %v33
  %196 = vmatpush.msra.mxu0 %v32
  %197 = vmatpush.msra.mxu0 %v31
  %198 = vmatmul.f32.gmra.mxu0 %v158
  %v199 = vpop.f32.mrf.mxu0
  %v200 = vadd.f32 %v181, %v199
  %201 = vdwg.mxu0
  %s202 = scalar_lea.vmem %s2, 40
  %v203 = vld [vmem:[%s202] sm:$0xff]
  %204 = vmatpush.msra.mxu0 0.0
  %205 = vmatpush.msra.mxu0 0.0
  %206 = vmatpush.msra.mxu0 0.0
  %207 = vmatpush.msra.mxu0 0.0
  %208 = vmatpush.msra.mxu0 0.0
  %209 = vmatpush.msra.mxu0 0.0
  %210 = vmatpush.msra.mxu0 0.0
  %211 = vmatpush.msra.mxu0 0.0
  %212 = vmatpush.msra.mxu0 0.0
  %213 = vmatpush.msra.mxu0 0.0
  %214 = vmatpush.msra.mxu0 0.0
  %215 = vmatpush.msra.mxu0 0.0
  %216 = vmatpush.msra.mxu0 %v39
  %217 = vmatpush.msra.mxu0 %v38
  %218 = vmatpush.msra.mxu0 %v37
  %219 = vmatpush.msra.mxu0 %v36
  %220 = vmatmul.f32.gmra.mxu0 %v158
  %v221 = vpop.f32.mrf.mxu0
  %v222 = vadd.f32 %v203, %v221
  %223 = vdwg.mxu0
  %v224 = vxor.u32 %v178, 2147483648
  %v225 = vmul.f32 %v224, 1.442695
  %v226 = vpow.pop %v225
  %v227 = vadd.f32 %v226, 1.0
  %v228 = vrcp.pop %v227
  %v229 = vmul.f32 %v227, %v228
  %v230 = vsub.f32 1.0, %v229
  %v231 = vmul.f32 %v228, %v230
  %v232 = vadd.f32 %v228, %v231
  %vm233 = vweird.f32 %v227
  %vm234 = vweird.f32 %v228
  %vm235 = vmor %vm233, %vm234
  %v236 = vsel %vm235, %v228, %v232
  %v237 = vand.u32 2147483647, %v227
  %vm238 = vcmp.eq.f32.partialorder %v237, 8.507059e+37
  %v239 = vand.u32 %v227, 2147483648
  %v240 = vor.u32 1.1754944e-38, %v239
  %v241 = vsel %vm238, %v240, %v236
  %v242 = vmul.f32 1.0, %v241
  %v243 = vmul.f32 %v242, %v131
  %v244 = vtanh.pop %v222
  %v245 = vmul.f32 %v25, %v244
  %v246 = vadd.f32 %v243, %v245
  %v247 = vxor.u32 %v200, 2147483648
  %v248 = vmul.f32 %v247, 1.442695
  %v249 = vpow.pop %v248
  %v250 = vadd.f32 %v249, 1.0
  %v251 = vrcp.pop %v250
  %v252 = vmul.f32 %v250, %v251
  %v253 = vsub.f32 1.0, %v252
  %v254 = vmul.f32 %v251, %v253
  %v255 = vadd.f32 %v251, %v254
  %vm256 = vweird.f32 %v250
  %vm257 = vweird.f32 %v251
  %vm258 = vmor %vm256, %vm257
  %v259 = vsel %vm258, %v251, %v255
  %v260 = vand.u32 2147483647, %v250
  %vm261 = vcmp.eq.f32.partialorder %v260, 8.507059e+37
  %v262 = vand.u32 %v250, 2147483648
  %v263 = vor.u32 1.1754944e-38, %v262
  %v264 = vsel %vm261, %v263, %v259
  %v265 = vmul.f32 1.0, %v264
  %v266 = vtanh.pop %v246
  %v267 = vmul.f32 %v265, %v266
  %s268 = scalar_lea.vmem %s3, 8
  %269 = vst.msk [vmem:[%s268] sm:$0xff] %vm41, %v267
  %s270 = scalar_lea.vmem %s4, 8
  %271 = vst.msk [vmem:[%s270] sm:$0xff] %vm41, %v246
  %s272 = scalar_lea.vmem %s2, 48
  %v273 = vld [vmem:[%s272] sm:$0xff]
  %v275 = vsel %vm41, %v267, 0
  %277 = vmatpush.msra.mxu0 0.0
  %278 = vmatpush.msra.mxu0 0.0
  %279 = vmatpush.msra.mxu0 0.0
  %280 = vmatpush.msra.mxu0 0.0
  %281 = vmatpush.msra.mxu0 0.0
  %282 = vmatpush.msra.mxu0 0.0
  %283 = vmatpush.msra.mxu0 0.0
  %284 = vmatpush.msra.mxu0 0.0
  %285 = vmatpush.msra.mxu0 0.0
  %286 = vmatpush.msra.mxu0 0.0
  %287 = vmatpush.msra.mxu0 0.0
  %288 = vmatpush.msra.mxu0 0.0
  %289 = vmatpush.msra.mxu0 %v29
  %290 = vmatpush.msra.mxu0 %v28
  %291 = vmatpush.msra.mxu0 %v27
  %292 = vmatpush.msra.mxu0 %v26
  %293 = vmatmul.f32.gmra.mxu0 %v275
  %v294 = vpop.f32.mrf.mxu0
  %v295 = vadd.f32 %v273, %v294
  %296 = vdwg.mxu0
  %s297 = scalar_lea.vmem %s2, 56
  %v298 = vld [vmem:[%s297] sm:$0xff]
  %299 = vmatpush.msra.mxu0 0.0
  %300 = vmatpush.msra.mxu0 0.0
  %301 = vmatpush.msra.mxu0 0.0
  %302 = vmatpush.msra.mxu0 0.0
  %303 = vmatpush.msra.mxu0 0.0
  %304 = vmatpush.msra.mxu0 0.0
  %305 = vmatpush.msra.mxu0 0.0
  %306 = vmatpush.msra.mxu0 0.0
  %307 = vmatpush.msra.mxu0 0.0
  %308 = vmatpush.msra.mxu0 0.0
  %309 = vmatpush.msra.mxu0 0.0
  %310 = vmatpush.msra.mxu0 0.0
  %311 = vmatpush.msra.mxu0 %v34
  %312 = vmatpush.msra.mxu0 %v33
  %313 = vmatpush.msra.mxu0 %v32
  %314 = vmatpush.msra.mxu0 %v31
  %315 = vmatmul.f32.gmra.mxu0 %v275
  %v316 = vpop.f32.mrf.mxu0
  %v317 = vadd.f32 %v298, %v316
  %318 = vdwg.mxu0
  %s319 = scalar_lea.vmem %s2, 64
  %v320 = vld [vmem:[%s319] sm:$0xff]
  %321 = vmatpush.msra.mxu0 0.0
  %322 = vmatpush.msra.mxu0 0.0
  %323 = vmatpush.msra.mxu0 0.0
  %324 = vmatpush.msra.mxu0 0.0
  %325 = vmatpush.msra.mxu0 0.0
  %326 = vmatpush.msra.mxu0 0.0
  %327 = vmatpush.msra.mxu0 0.0
  %328 = vmatpush.msra.mxu0 0.0
  %329 = vmatpush.msra.mxu0 0.0
  %330 = vmatpush.msra.mxu0 0.0
  %331 = vmatpush.msra.mxu0 0.0
  %332 = vmatpush.msra.mxu0 0.0
  %333 = vmatpush.msra.mxu0 %v39
  %334 = vmatpush.msra.mxu0 %v38
  %335 = vmatpush.msra.mxu0 %v37
  %336 = vmatpush.msra.mxu0 %v36
  %337 = vmatmul.f32.gmra.mxu0 %v275
  %v338 = vpop.f32.mrf.mxu0
  %v339 = vadd.f32 %v320, %v338
  %340 = vdwg.mxu0
  %v341 = vxor.u32 %v295, 2147483648
  %v342 = vmul.f32 %v341, 1.442695
  %v343 = vpow.pop %v342
  %v344 = vadd.f32 %v343, 1.0
  %v345 = vrcp.pop %v344
  %v346 = vmul.f32 %v344, %v345
  %v347 = vsub.f32 1.0, %v346
  %v348 = vmul.f32 %v345, %v347
  %v349 = vadd.f32 %v345, %v348
  %vm350 = vweird.f32 %v344
  %vm351 = vweird.f32 %v345
  %vm352 = vmor %vm350, %vm351
  %v353 = vsel %vm352, %v345, %v349
  %v354 = vand.u32 2147483647, %v344
  %vm355 = vcmp.eq.f32.partialorder %v354, 8.507059e+37
  %v356 = vand.u32 %v344, 2147483648
  %v357 = vor.u32 1.1754944e-38, %v356
  %v358 = vsel %vm355, %v357, %v353
  %v359 = vmul.f32 1.0, %v358
  %v360 = vmul.f32 %v359, %v246
  %v361 = vtanh.pop %v339
  %v362 = vmul.f32 %v25, %v361
  %v363 = vadd.f32 %v360, %v362
  %v364 = vxor.u32 %v317, 2147483648
  %v365 = vmul.f32 %v364, 1.442695
  %v366 = vpow.pop %v365
  %v367 = vadd.f32 %v366, 1.0
  %v368 = vrcp.pop %v367
  %v369 = vmul.f32 %v367, %v368
  %v370 = vsub.f32 1.0, %v369
  %v371 = vmul.f32 %v368, %v370
  %v372 = vadd.f32 %v368, %v371
  %vm373 = vweird.f32 %v367
  %vm374 = vweird.f32 %v368
  %vm375 = vmor %vm373, %vm374
  %v376 = vsel %vm375, %v368, %v372
  %v377 = vand.u32 2147483647, %v367
  %vm378 = vcmp.eq.f32.partialorder %v377, 8.507059e+37
  %v379 = vand.u32 %v367, 2147483648
  %v380 = vor.u32 1.1754944e-38, %v379
  %v381 = vsel %vm378, %v380, %v376
  %v382 = vmul.f32 1.0, %v381
  %v383 = vtanh.pop %v363
  %v384 = vmul.f32 %v382, %v383
  %s385 = scalar_lea.vmem %s3, 16
  %386 = vst.msk [vmem:[%s385] sm:$0xff] %vm41, %v384
  %s387 = scalar_lea.vmem %s4, 16
  %388 = vst.msk [vmem:[%s387] sm:$0xff] %vm41, %v363
  %s389 = scalar_lea.vmem %s2, 72
  %v390 = vld [vmem:[%s389] sm:$0xff]
  %v392 = vsel %vm41, %v384, 0
  %394 = vmatpush.msra.mxu0 0.0
  %395 = vmatpush.msra.mxu0 0.0
  %396 = vmatpush.msra.mxu0 0.0
  %397 = vmatpush.msra.mxu0 0.0
  %398 = vmatpush.msra.mxu0 0.0
  %399 = vmatpush.msra.mxu0 0.0
  %400 = vmatpush.msra.mxu0 0.0
  %401 = vmatpush.msra.mxu0 0.0
  %402 = vmatpush.msra.mxu0 0.0
  %403 = vmatpush.msra.mxu0 0.0
  %404 = vmatpush.msra.mxu0 0.0
  %405 = vmatpush.msra.mxu0 0.0
  %406 = vmatpush.msra.mxu0 %v29
  %407 = vmatpush.msra.mxu0 %v28
  %408 = vmatpush.msra.mxu0 %v27
  %409 = vmatpush.msra.mxu0 %v26
  %410 = vmatmul.f32.gmra.mxu0 %v392
  %v411 = vpop.f32.mrf.mxu0
  %v412 = vadd.f32 %v390, %v411
  %413 = vdwg.mxu0
  %s414 = scalar_lea.vmem %s2, 80
  %v415 = vld [vmem:[%s414] sm:$0xff]
  %416 = vmatpush.msra.mxu0 0.0
  %417 = vmatpush.msra.mxu0 0.0
  %418 = vmatpush.msra.mxu0 0.0
  %419 = vmatpush.msra.mxu0 0.0
  %420 = vmatpush.msra.mxu0 0.0
  %421 = vmatpush.msra.mxu0 0.0
  %422 = vmatpush.msra.mxu0 0.0
  %423 = vmatpush.msra.mxu0 0.0
  %424 = vmatpush.msra.mxu0 0.0
  %425 = vmatpush.msra.mxu0 0.0
  %426 = vmatpush.msra.mxu0 0.0
  %427 = vmatpush.msra.mxu0 0.0
  %428 = vmatpush.msra.mxu0 %v34
  %429 = vmatpush.msra.mxu0 %v33
  %430 = vmatpush.msra.mxu0 %v32
  %431 = vmatpush.msra.mxu0 %v31
  %432 = vmatmul.f32.gmra.mxu0 %v392
  %v433 = vpop.f32.mrf.mxu0
  %v434 = vadd.f32 %v415, %v433
  %435 = vdwg.mxu0
  %s436 = scalar_lea.vmem %s2, 88
  %v437 = vld [vmem:[%s436] sm:$0xff]
  %438 = vmatpush.msra.mxu0 0.0
  %439 = vmatpush.msra.mxu0 0.0
  %440 = vmatpush.msra.mxu0 0.0
  %441 = vmatpush.msra.mxu0 0.0
  %442 = vmatpush.msra.mxu0 0.0
  %443 = vmatpush.msra.mxu0 0.0
  %444 = vmatpush.msra.mxu0 0.0
  %445 = vmatpush.msra.mxu0 0.0
  %446 = vmatpush.msra.mxu0 0.0
  %447 = vmatpush.msra.mxu0 0.0
  %448 = vmatpush.msra.mxu0 0.0
  %449 = vmatpush.msra.mxu0 0.0
  %450 = vmatpush.msra.mxu0 %v39
  %451 = vmatpush.msra.mxu0 %v38
  %452 = vmatpush.msra.mxu0 %v37
  %453 = vmatpush.msra.mxu0 %v36
  %454 = vmatmul.f32.gmra.mxu0 %v392
  %v455 = vpop.f32.mrf.mxu0
  %v456 = vadd.f32 %v437, %v455
  %457 = vdwg.mxu0
  %v458 = vxor.u32 %v412, 2147483648
  %v459 = vmul.f32 %v458, 1.442695
  %v460 = vpow.pop %v459
  %v461 = vadd.f32 %v460, 1.0
  %v462 = vrcp.pop %v461
  %v463 = vmul.f32 %v461, %v462
  %v464 = vsub.f32 1.0, %v463
  %v465 = vmul.f32 %v462, %v464
  %v466 = vadd.f32 %v462, %v465
  %vm467 = vweird.f32 %v461
  %vm468 = vweird.f32 %v462
  %vm469 = vmor %vm467, %vm468
  %v470 = vsel %vm469, %v462, %v466
  %v471 = vand.u32 2147483647, %v461
  %vm472 = vcmp.eq.f32.partialorder %v471, 8.507059e+37
  %v473 = vand.u32 %v461, 2147483648
  %v474 = vor.u32 1.1754944e-38, %v473
  %v475 = vsel %vm472, %v474, %v470
  %v476 = vmul.f32 1.0, %v475
  %v477 = vmul.f32 %v476, %v363
  %v478 = vtanh.pop %v456
  %v479 = vmul.f32 %v25, %v478
  %v480 = vadd.f32 %v477, %v479
  %v481 = vxor.u32 %v434, 2147483648
  %v482 = vmul.f32 %v481, 1.442695
  %v483 = vpow.pop %v482
  %v484 = vadd.f32 %v483, 1.0
  %v485 = vrcp.pop %v484
  %v486 = vmul.f32 %v484, %v485
  %v487 = vsub.f32 1.0, %v486
  %v488 = vmul.f32 %v485, %v487
  %v489 = vadd.f32 %v485, %v488
  %vm490 = vweird.f32 %v484
  %vm491 = vweird.f32 %v485
  %vm492 = vmor %vm490, %vm491
  %v493 = vsel %vm492, %v485, %v489
  %v494 = vand.u32 2147483647, %v484
  %vm495 = vcmp.eq.f32.partialorder %v494, 8.507059e+37
  %v496 = vand.u32 %v484, 2147483648
  %v497 = vor.u32 1.1754944e-38, %v496
  %v498 = vsel %vm495, %v497, %v493
  %v499 = vmul.f32 1.0, %v498
  %v500 = vtanh.pop %v480
  %v501 = vmul.f32 %v499, %v500
  %s502 = scalar_lea.vmem %s3, 24
  %503 = vst.msk [vmem:[%s502] sm:$0xff] %vm41, %v501
  %s504 = scalar_lea.vmem %s4, 24
  %505 = vst.msk [vmem:[%s504] sm:$0xff] %vm41, %v480
  %s506 = scalar_lea.vmem %s2, 96
  %v507 = vld [vmem:[%s506] sm:$0xff]
  %v509 = vsel %vm41, %v501, 0
  %511 = vmatpush.msra.mxu0 0.0
  %512 = vmatpush.msra.mxu0 0.0
  %513 = vmatpush.msra.mxu0 0.0
  %514 = vmatpush.msra.mxu0 0.0
  %515 = vmatpush.msra.mxu0 0.0
  %516 = vmatpush.msra.mxu0 0.0
  %517 = vmatpush.msra.mxu0 0.0
  %518 = vmatpush.msra.mxu0 0.0
  %519 = vmatpush.msra.mxu0 0.0
  %520 = vmatpush.msra.mxu0 0.0
  %521 = vmatpush.msra.mxu0 0.0
  %522 = vmatpush.msra.mxu0 0.0
  %523 = vmatpush.msra.mxu0 %v29
  %524 = vmatpush.msra.mxu0 %v28
  %525 = vmatpush.msra.mxu0 %v27
  %526 = vmatpush.msra.mxu0 %v26
  %527 = vmatmul.f32.gmra.mxu0 %v509
  %v528 = vpop.f32.mrf.mxu0
  %v529 = vadd.f32 %v507, %v528
  %530 = vdwg.mxu0
  %s531 = scalar_lea.vmem %s2, 104
  %v532 = vld [vmem:[%s531] sm:$0xff]
  %533 = vmatpush.msra.mxu0 0.0
  %534 = vmatpush.msra.mxu0 0.0
  %535 = vmatpush.msra.mxu0 0.0
  %536 = vmatpush.msra.mxu0 0.0
  %537 = vmatpush.msra.mxu0 0.0
  %538 = vmatpush.msra.mxu0 0.0
  %539 = vmatpush.msra.mxu0 0.0
  %540 = vmatpush.msra.mxu0 0.0
  %541 = vmatpush.msra.mxu0 0.0
  %542 = vmatpush.msra.mxu0 0.0
  %543 = vmatpush.msra.mxu0 0.0
  %544 = vmatpush.msra.mxu0 0.0
  %545 = vmatpush.msra.mxu0 %v34
  %546 = vmatpush.msra.mxu0 %v33
  %547 = vmatpush.msra.mxu0 %v32
  %548 = vmatpush.msra.mxu0 %v31
  %549 = vmatmul.f32.gmra.mxu0 %v509
  %v550 = vpop.f32.mrf.mxu0
  %v551 = vadd.f32 %v532, %v550
  %552 = vdwg.mxu0
  %s553 = scalar_lea.vmem %s2, 112
  %v554 = vld [vmem:[%s553] sm:$0xff]
  %555 = vmatpush.msra.mxu0 0.0
  %556 = vmatpush.msra.mxu0 0.0
  %557 = vmatpush.msra.mxu0 0.0
  %558 = vmatpush.msra.mxu0 0.0
  %559 = vmatpush.msra.mxu0 0.0
  %560 = vmatpush.msra.mxu0 0.0
  %561 = vmatpush.msra.mxu0 0.0
  %562 = vmatpush.msra.mxu0 0.0
  %563 = vmatpush.msra.mxu0 0.0
  %564 = vmatpush.msra.mxu0 0.0
  %565 = vmatpush.msra.mxu0 0.0
  %566 = vmatpush.msra.mxu0 0.0
  %567 = vmatpush.msra.mxu0 %v39
  %568 = vmatpush.msra.mxu0 %v38
  %569 = vmatpush.msra.mxu0 %v37
  %570 = vmatpush.msra.mxu0 %v36
  %571 = vmatmul.f32.gmra.mxu0 %v509
  %v572 = vpop.f32.mrf.mxu0
  %v573 = vadd.f32 %v554, %v572
  %574 = vdwg.mxu0
  %v575 = vxor.u32 %v529, 2147483648
  %v576 = vmul.f32 %v575, 1.442695
  %v577 = vpow.pop %v576
  %v578 = vadd.f32 %v577, 1.0
  %v579 = vrcp.pop %v578
  %v580 = vmul.f32 %v578, %v579
  %v581 = vsub.f32 1.0, %v580
  %v582 = vmul.f32 %v579, %v581
  %v583 = vadd.f32 %v579, %v582
  %vm584 = vweird.f32 %v578
  %vm585 = vweird.f32 %v579
  %vm586 = vmor %vm584, %vm585
  %v587 = vsel %vm586, %v579, %v583
  %v588 = vand.u32 2147483647, %v578
  %vm589 = vcmp.eq.f32.partialorder %v588, 8.507059e+37
  %v590 = vand.u32 %v578, 2147483648
  %v591 = vor.u32 1.1754944e-38, %v590
  %v592 = vsel %vm589, %v591, %v587
  %v593 = vmul.f32 1.0, %v592
  %v594 = vmul.f32 %v593, %v480
  %v595 = vtanh.pop %v573
  %v596 = vmul.f32 %v25, %v595
  %v597 = vadd.f32 %v594, %v596
  %v598 = vxor.u32 %v551, 2147483648
  %v599 = vmul.f32 %v598, 1.442695
  %v600 = vpow.pop %v599
  %v601 = vadd.f32 %v600, 1.0
  %v602 = vrcp.pop %v601
  %v603 = vmul.f32 %v601, %v602
  %v604 = vsub.f32 1.0, %v603
  %v605 = vmul.f32 %v602, %v604
  %v606 = vadd.f32 %v602, %v605
  %vm607 = vweird.f32 %v601
  %vm608 = vweird.f32 %v602
  %vm609 = vmor %vm607, %vm608
  %v610 = vsel %vm609, %v602, %v606
  %v611 = vand.u32 2147483647, %v601
  %vm612 = vcmp.eq.f32.partialorder %v611, 8.507059e+37
  %v613 = vand.u32 %v601, 2147483648
  %v614 = vor.u32 1.1754944e-38, %v613
  %v615 = vsel %vm612, %v614, %v610
  %v616 = vmul.f32 1.0, %v615
  %v617 = vtanh.pop %v597
  %v618 = vmul.f32 %v616, %v617
  %s619 = scalar_lea.vmem %s3, 32
  %620 = vst.msk [vmem:[%s619] sm:$0xff] %vm41, %v618
  %s621 = scalar_lea.vmem %s4, 32
  %622 = vst.msk [vmem:[%s621] sm:$0xff] %vm41, %v597
  %s623 = scalar_lea.vmem %s2, 120
  %v624 = vld [vmem:[%s623] sm:$0xff]
  %v626 = vsel %vm41, %v618, 0
  %628 = vmatpush.msra.mxu0 0.0
  %629 = vmatpush.msra.mxu0 0.0
  %630 = vmatpush.msra.mxu0 0.0
  %631 = vmatpush.msra.mxu0 0.0
  %632 = vmatpush.msra.mxu0 0.0
  %633 = vmatpush.msra.mxu0 0.0
  %634 = vmatpush.msra.mxu0 0.0
  %635 = vmatpush.msra.mxu0 0.0
  %636 = vmatpush.msra.mxu0 0.0
  %637 = vmatpush.msra.mxu0 0.0
  %638 = vmatpush.msra.mxu0 0.0
  %639 = vmatpush.msra.mxu0 0.0
  %640 = vmatpush.msra.mxu0 %v29
  %641 = vmatpush.msra.mxu0 %v28
  %642 = vmatpush.msra.mxu0 %v27
  %643 = vmatpush.msra.mxu0 %v26
  %644 = vmatmul.f32.gmra.mxu0 %v626
  %v645 = vpop.f32.mrf.mxu0
  %v646 = vadd.f32 %v624, %v645
  %647 = vdwg.mxu0
  %s648 = scalar_lea.vmem %s2, 128
  %v649 = vld [vmem:[%s648] sm:$0xff]
  %650 = vmatpush.msra.mxu0 0.0
  %651 = vmatpush.msra.mxu0 0.0
  %652 = vmatpush.msra.mxu0 0.0
  %653 = vmatpush.msra.mxu0 0.0
  %654 = vmatpush.msra.mxu0 0.0
  %655 = vmatpush.msra.mxu0 0.0
  %656 = vmatpush.msra.mxu0 0.0
  %657 = vmatpush.msra.mxu0 0.0
  %658 = vmatpush.msra.mxu0 0.0
  %659 = vmatpush.msra.mxu0 0.0
  %660 = vmatpush.msra.mxu0 0.0
  %661 = vmatpush.msra.mxu0 0.0
  %662 = vmatpush.msra.mxu0 %v34
  %663 = vmatpush.msra.mxu0 %v33
  %664 = vmatpush.msra.mxu0 %v32
  %665 = vmatpush.msra.mxu0 %v31
  %666 = vmatmul.f32.gmra.mxu0 %v626
  %v667 = vpop.f32.mrf.mxu0
  %v668 = vadd.f32 %v649, %v667
  %669 = vdwg.mxu0
  %s670 = scalar_lea.vmem %s2, 136
  %v671 = vld [vmem:[%s670] sm:$0xff]
  %672 = vmatpush.msra.mxu0 0.0
  %673 = vmatpush.msra.mxu0 0.0
  %674 = vmatpush.msra.mxu0 0.0
  %675 = vmatpush.msra.mxu0 0.0
  %676 = vmatpush.msra.mxu0 0.0
  %677 = vmatpush.msra.mxu0 0.0
  %678 = vmatpush.msra.mxu0 0.0
  %679 = vmatpush.msra.mxu0 0.0
  %680 = vmatpush.msra.mxu0 0.0
  %681 = vmatpush.msra.mxu0 0.0
  %682 = vmatpush.msra.mxu0 0.0
  %683 = vmatpush.msra.mxu0 0.0
  %684 = vmatpush.msra.mxu0 %v39
  %685 = vmatpush.msra.mxu0 %v38
  %686 = vmatpush.msra.mxu0 %v37
  %687 = vmatpush.msra.mxu0 %v36
  %688 = vmatmul.f32.gmra.mxu0 %v626
  %v689 = vpop.f32.mrf.mxu0
  %v690 = vadd.f32 %v671, %v689
  %691 = vdwg.mxu0
  %v692 = vxor.u32 %v646, 2147483648
  %v693 = vmul.f32 %v692, 1.442695
  %v694 = vpow.pop %v693
  %v695 = vadd.f32 %v694, 1.0
  %v696 = vrcp.pop %v695
  %v697 = vmul.f32 %v695, %v696
  %v698 = vsub.f32 1.0, %v697
  %v699 = vmul.f32 %v696, %v698
  %v700 = vadd.f32 %v696, %v699
  %vm701 = vweird.f32 %v695
  %vm702 = vweird.f32 %v696
  %vm703 = vmor %vm701, %vm702
  %v704 = vsel %vm703, %v696, %v700
  %v705 = vand.u32 2147483647, %v695
  %vm706 = vcmp.eq.f32.partialorder %v705, 8.507059e+37
  %v707 = vand.u32 %v695, 2147483648
  %v708 = vor.u32 1.1754944e-38, %v707
  %v709 = vsel %vm706, %v708, %v704
  %v710 = vmul.f32 1.0, %v709
  %v711 = vmul.f32 %v710, %v597
  %v712 = vtanh.pop %v690
  %v713 = vmul.f32 %v25, %v712
  %v714 = vadd.f32 %v711, %v713
  %v715 = vxor.u32 %v668, 2147483648
  %v716 = vmul.f32 %v715, 1.442695
  %v717 = vpow.pop %v716
  %v718 = vadd.f32 %v717, 1.0
  %v719 = vrcp.pop %v718
  %v720 = vmul.f32 %v718, %v719
  %v721 = vsub.f32 1.0, %v720
  %v722 = vmul.f32 %v719, %v721
  %v723 = vadd.f32 %v719, %v722
  %vm724 = vweird.f32 %v718
  %vm725 = vweird.f32 %v719
  %vm726 = vmor %vm724, %vm725
  %v727 = vsel %vm726, %v719, %v723
  %v728 = vand.u32 2147483647, %v718
  %vm729 = vcmp.eq.f32.partialorder %v728, 8.507059e+37
  %v730 = vand.u32 %v718, 2147483648
  %v731 = vor.u32 1.1754944e-38, %v730
  %v732 = vsel %vm729, %v731, %v727
  %v733 = vmul.f32 1.0, %v732
  %v734 = vtanh.pop %v714
  %v735 = vmul.f32 %v733, %v734
  %s736 = scalar_lea.vmem %s3, 40
  %737 = vst.msk [vmem:[%s736] sm:$0xff] %vm41, %v735
  %s738 = scalar_lea.vmem %s4, 40
  %739 = vst.msk [vmem:[%s738] sm:$0xff] %vm41, %v714
  %s740 = scalar_lea.vmem %s2, 144
  %v741 = vld [vmem:[%s740] sm:$0xff]
  %v743 = vsel %vm41, %v735, 0
  %745 = vmatpush.msra.mxu0 0.0
  %746 = vmatpush.msra.mxu0 0.0
  %747 = vmatpush.msra.mxu0 0.0
  %748 = vmatpush.msra.mxu0 0.0
  %749 = vmatpush.msra.mxu0 0.0
  %750 = vmatpush.msra.mxu0 0.0
  %751 = vmatpush.msra.mxu0 0.0
  %752 = vmatpush.msra.mxu0 0.0
  %753 = vmatpush.msra.mxu0 0.0
  %754 = vmatpush.msra.mxu0 0.0
  %755 = vmatpush.msra.mxu0 0.0
  %756 = vmatpush.msra.mxu0 0.0
  %757 = vmatpush.msra.mxu0 %v29
  %758 = vmatpush.msra.mxu0 %v28
  %759 = vmatpush.msra.mxu0 %v27
  %760 = vmatpush.msra.mxu0 %v26
  %761 = vmatmul.f32.gmra.mxu0 %v743
  %v762 = vpop.f32.mrf.mxu0
  %v763 = vadd.f32 %v741, %v762
  %764 = vdwg.mxu0
  %s765 = scalar_lea.vmem %s2, 152
  %v766 = vld [vmem:[%s765] sm:$0xff]
  %767 = vmatpush.msra.mxu0 0.0
  %768 = vmatpush.msra.mxu0 0.0
  %769 = vmatpush.msra.mxu0 0.0
  %770 = vmatpush.msra.mxu0 0.0
  %771 = vmatpush.msra.mxu0 0.0
  %772 = vmatpush.msra.mxu0 0.0
  %773 = vmatpush.msra.mxu0 0.0
  %774 = vmatpush.msra.mxu0 0.0
  %775 = vmatpush.msra.mxu0 0.0
  %776 = vmatpush.msra.mxu0 0.0
  %777 = vmatpush.msra.mxu0 0.0
  %778 = vmatpush.msra.mxu0 0.0
  %779 = vmatpush.msra.mxu0 %v34
  %780 = vmatpush.msra.mxu0 %v33
  %781 = vmatpush.msra.mxu0 %v32
  %782 = vmatpush.msra.mxu0 %v31
  %783 = vmatmul.f32.gmra.mxu0 %v743
  %v784 = vpop.f32.mrf.mxu0
  %v785 = vadd.f32 %v766, %v784
  %786 = vdwg.mxu0
  %s787 = scalar_lea.vmem %s2, 160
  %v788 = vld [vmem:[%s787] sm:$0xff]
  %789 = vmatpush.msra.mxu0 0.0
  %790 = vmatpush.msra.mxu0 0.0
  %791 = vmatpush.msra.mxu0 0.0
  %792 = vmatpush.msra.mxu0 0.0
  %793 = vmatpush.msra.mxu0 0.0
  %794 = vmatpush.msra.mxu0 0.0
  %795 = vmatpush.msra.mxu0 0.0
  %796 = vmatpush.msra.mxu0 0.0
  %797 = vmatpush.msra.mxu0 0.0
  %798 = vmatpush.msra.mxu0 0.0
  %799 = vmatpush.msra.mxu0 0.0
  %800 = vmatpush.msra.mxu0 0.0
  %801 = vmatpush.msra.mxu0 %v39
  %802 = vmatpush.msra.mxu0 %v38
  %803 = vmatpush.msra.mxu0 %v37
  %804 = vmatpush.msra.mxu0 %v36
  %805 = vmatmul.f32.gmra.mxu0 %v743
  %v806 = vpop.f32.mrf.mxu0
  %v807 = vadd.f32 %v788, %v806
  %808 = vdwg.mxu0
  %v809 = vxor.u32 %v763, 2147483648
  %v810 = vmul.f32 %v809, 1.442695
  %v811 = vpow.pop %v810
  %v812 = vadd.f32 %v811, 1.0
  %v813 = vrcp.pop %v812
  %v814 = vmul.f32 %v812, %v813
  %v815 = vsub.f32 1.0, %v814
  %v816 = vmul.f32 %v813, %v815
  %v817 = vadd.f32 %v813, %v816
  %vm818 = vweird.f32 %v812
  %vm819 = vweird.f32 %v813
  %vm820 = vmor %vm818, %vm819
  %v821 = vsel %vm820, %v813, %v817
  %v822 = vand.u32 2147483647, %v812
  %vm823 = vcmp.eq.f32.partialorder %v822, 8.507059e+37
  %v824 = vand.u32 %v812, 2147483648
  %v825 = vor.u32 1.1754944e-38, %v824
  %v826 = vsel %vm823, %v825, %v821
  %v827 = vmul.f32 1.0, %v826
  %v828 = vmul.f32 %v827, %v714
  %v829 = vtanh.pop %v807
  %v830 = vmul.f32 %v25, %v829
  %v831 = vadd.f32 %v828, %v830
  %v832 = vxor.u32 %v785, 2147483648
  %v833 = vmul.f32 %v832, 1.442695
  %v834 = vpow.pop %v833
  %v835 = vadd.f32 %v834, 1.0
  %v836 = vrcp.pop %v835
  %v837 = vmul.f32 %v835, %v836
  %v838 = vsub.f32 1.0, %v837
  %v839 = vmul.f32 %v836, %v838
  %v840 = vadd.f32 %v836, %v839
  %vm841 = vweird.f32 %v835
  %vm842 = vweird.f32 %v836
  %vm843 = vmor %vm841, %vm842
  %v844 = vsel %vm843, %v836, %v840
  %v845 = vand.u32 2147483647, %v835
  %vm846 = vcmp.eq.f32.partialorder %v845, 8.507059e+37
  %v847 = vand.u32 %v835, 2147483648
  %v848 = vor.u32 1.1754944e-38, %v847
  %v849 = vsel %vm846, %v848, %v844
  %v850 = vmul.f32 1.0, %v849
  %v851 = vtanh.pop %v831
  %v852 = vmul.f32 %v850, %v851
  %s853 = scalar_lea.vmem %s3, 48
  %854 = vst.msk [vmem:[%s853] sm:$0xff] %vm41, %v852
  %s855 = scalar_lea.vmem %s4, 48
  %856 = vst.msk [vmem:[%s855] sm:$0xff] %vm41, %v831
  %s857 = scalar_lea.vmem %s2, 168
  %v858 = vld [vmem:[%s857] sm:$0xff]
  %v860 = vsel %vm41, %v852, 0
  %862 = vmatpush.msra.mxu0 0.0
  %863 = vmatpush.msra.mxu0 0.0
  %864 = vmatpush.msra.mxu0 0.0
  %865 = vmatpush.msra.mxu0 0.0
  %866 = vmatpush.msra.mxu0 0.0
  %867 = vmatpush.msra.mxu0 0.0
  %868 = vmatpush.msra.mxu0 0.0
  %869 = vmatpush.msra.mxu0 0.0
  %870 = vmatpush.msra.mxu0 0.0
  %871 = vmatpush.msra.mxu0 0.0
  %872 = vmatpush.msra.mxu0 0.0
  %873 = vmatpush.msra.mxu0 0.0
  %874 = vmatpush.msra.mxu0 %v29
  %875 = vmatpush.msra.mxu0 %v28
  %876 = vmatpush.msra.mxu0 %v27
  %877 = vmatpush.msra.mxu0 %v26
  %878 = vmatmul.f32.gmra.mxu0 %v860
  %v879 = vpop.f32.mrf.mxu0
  %v880 = vadd.f32 %v858, %v879
  %881 = vdwg.mxu0
  %s882 = scalar_lea.vmem %s2, 176
  %v883 = vld [vmem:[%s882] sm:$0xff]
  %884 = vmatpush.msra.mxu0 0.0
  %885 = vmatpush.msra.mxu0 0.0
  %886 = vmatpush.msra.mxu0 0.0
  %887 = vmatpush.msra.mxu0 0.0
  %888 = vmatpush.msra.mxu0 0.0
  %889 = vmatpush.msra.mxu0 0.0
  %890 = vmatpush.msra.mxu0 0.0
  %891 = vmatpush.msra.mxu0 0.0
  %892 = vmatpush.msra.mxu0 0.0
  %893 = vmatpush.msra.mxu0 0.0
  %894 = vmatpush.msra.mxu0 0.0
  %895 = vmatpush.msra.mxu0 0.0
  %896 = vmatpush.msra.mxu0 %v34
  %897 = vmatpush.msra.mxu0 %v33
  %898 = vmatpush.msra.mxu0 %v32
  %899 = vmatpush.msra.mxu0 %v31
  %900 = vmatmul.f32.gmra.mxu0 %v860
  %v901 = vpop.f32.mrf.mxu0
  %v902 = vadd.f32 %v883, %v901
  %903 = vdwg.mxu0
  %s904 = scalar_lea.vmem %s2, 184
  %v905 = vld [vmem:[%s904] sm:$0xff]
  %906 = vmatpush.msra.mxu0 0.0
  %907 = vmatpush.msra.mxu0 0.0
  %908 = vmatpush.msra.mxu0 0.0
  %909 = vmatpush.msra.mxu0 0.0
  %910 = vmatpush.msra.mxu0 0.0
  %911 = vmatpush.msra.mxu0 0.0
  %912 = vmatpush.msra.mxu0 0.0
  %913 = vmatpush.msra.mxu0 0.0
  %914 = vmatpush.msra.mxu0 0.0
  %915 = vmatpush.msra.mxu0 0.0
  %916 = vmatpush.msra.mxu0 0.0
  %917 = vmatpush.msra.mxu0 0.0
  %918 = vmatpush.msra.mxu0 %v39
  %919 = vmatpush.msra.mxu0 %v38
  %920 = vmatpush.msra.mxu0 %v37
  %921 = vmatpush.msra.mxu0 %v36
  %922 = vmatmul.f32.gmra.mxu0 %v860
  %v923 = vpop.f32.mrf.mxu0
  %v924 = vadd.f32 %v905, %v923
  %925 = vdwg.mxu0
  %v926 = vxor.u32 %v880, 2147483648
  %v927 = vmul.f32 %v926, 1.442695
  %v928 = vpow.pop %v927
  %v929 = vadd.f32 %v928, 1.0
  %v930 = vrcp.pop %v929
  %v931 = vmul.f32 %v929, %v930
  %v932 = vsub.f32 1.0, %v931
  %v933 = vmul.f32 %v930, %v932
  %v934 = vadd.f32 %v930, %v933
  %vm935 = vweird.f32 %v929
  %vm936 = vweird.f32 %v930
  %vm937 = vmor %vm935, %vm936
  %v938 = vsel %vm937, %v930, %v934
  %v939 = vand.u32 2147483647, %v929
  %vm940 = vcmp.eq.f32.partialorder %v939, 8.507059e+37
  %v941 = vand.u32 %v929, 2147483648
  %v942 = vor.u32 1.1754944e-38, %v941
  %v943 = vsel %vm940, %v942, %v938
  %v944 = vmul.f32 1.0, %v943
  %v945 = vmul.f32 %v944, %v831
  %v946 = vtanh.pop %v924
  %v947 = vmul.f32 %v25, %v946
  %v948 = vadd.f32 %v945, %v947
  %v949 = vxor.u32 %v902, 2147483648
  %v950 = vmul.f32 %v949, 1.442695
  %v951 = vpow.pop %v950
  %v952 = vadd.f32 %v951, 1.0
  %v953 = vrcp.pop %v952
  %v954 = vmul.f32 %v952, %v953
  %v955 = vsub.f32 1.0, %v954
  %v956 = vmul.f32 %v953, %v955
  %v957 = vadd.f32 %v953, %v956
  %vm958 = vweird.f32 %v952
  %vm959 = vweird.f32 %v953
  %vm960 = vmor %vm958, %vm959
  %v961 = vsel %vm960, %v953, %v957
  %v962 = vand.u32 2147483647, %v952
  %vm963 = vcmp.eq.f32.partialorder %v962, 8.507059e+37
  %v964 = vand.u32 %v952, 2147483648
  %v965 = vor.u32 1.1754944e-38, %v964
  %v966 = vsel %vm963, %v965, %v961
  %v967 = vmul.f32 1.0, %v966
  %v968 = vtanh.pop %v948
  %v969 = vmul.f32 %v967, %v968
  %s970 = scalar_lea.vmem %s3, 56
  %971 = vst.msk [vmem:[%s970] sm:$0xff] %vm41, %v969
  %s972 = scalar_lea.vmem %s4, 56
  %973 = vst.msk [vmem:[%s972] sm:$0xff] %vm41, %v948
  %974 = vst.msk [vmem:[#allocation2] sm:$0xff] %vm41, %v969
  %975 = vst.msk [vmem:[#allocation3] sm:$0xff] %vm41, %v948
  // Predicated region
  $region18: #{ealstm_model_forward.1} parent=0 // pred_check
    _
  $region19: #{ealstm_model_forward.1} parent=0 // pred_check_branch
    %977 = sbr.rel (0) target = $region21
  $region20: #{ealstm_model_forward.1} parent=0 // pred_region
    _
  $region21: #{ealstm_model_forward.1} parent=0 // pred_fallthru
    _
  // Predicated region
  $region22: #{ealstm_model_forward.1} parent=0 // pred_check
    _
  $region23: #{ealstm_model_forward.1} parent=0 // pred_check_branch
    %979 = sbr.rel (0) target = $region25
  $region24: #{ealstm_model_forward.1} parent=0 // pred_region
    _
  $region25: #{ealstm_model_forward.1} parent=0 // pred_fallthru
    _
  // Predicated region
  $region26: #{ealstm_model_forward.1} parent=0 // pred_check
    _
  $region27: #{ealstm_model_forward.1} parent=0 // pred_check_branch
    %981 = sbr.rel (0) target = $region29
  $region28: #{ealstm_model_forward.1} parent=0 // pred_region
    _
  $region29: #{ealstm_model_forward.1} parent=0 // pred_fallthru
    _
  // Predicated region
  $region30: #{ealstm_model_forward.1} parent=0 // pred_check
    _
  $region31: #{ealstm_model_forward.1} parent=0 // pred_check_branch
    %983 = sbr.rel (0) target = $region33
  $region32: #{ealstm_model_forward.1} parent=0 // pred_region
    _
  $region33: #{ealstm_model_forward.1} parent=0 // pred_fallthru
    _

</llo_original>
